<compile_context>
chip_gen: v5e
topology: v5e:2x2
jax: 0.10.0
libtpu: 0.0.40
codegen_flags: <defaults>
</compile_context>

<pallas_src>
from functools import partial

import jax
import jax.numpy as jnp
from jax import lax
from jax.experimental import pallas as pl
from jax.experimental.pallas import tpu as pltpu


def _round_up(x, m):
    return ((x + m - 1) // m) * m


def _pad_rows(w, rows_p):
    return jnp.pad(w, ((0, rows_p - w.shape[0]), (0, 0)))


def _pad_gate_cols(w, H, Hp):
    """(rows, 4H) -> (rows, 4Hp): zero-pad each PyTorch gate block [i|f|g|o]."""
    rows = w.shape[0]
    w4 = w.reshape(rows, 4, H)
    w4 = jnp.pad(w4, ((0, 0), (0, 0), (0, Hp - H)))
    return w4.reshape(rows, 4 * Hp)


def _detect_tpu():
    """Best-effort TPU generation / VMEM-capacity detection (safe fallbacks)."""
    vmem_cap = 64 * 1024 * 1024            # conservative default (v7x per-core)
    is_v7x = False
    try:
        info = pltpu.get_tpu_info()
        cap = int(getattr(info, "vmem_capacity_bytes", vmem_cap))
        if cap > 0:
            vmem_cap = cap
    except Exception:
        pass
    try:
        kind = jax.devices()[0].device_kind.lower()
        is_v7x = "v7" in kind
    except Exception:
        pass
    return is_v7x, vmem_cap


# ----------------------------------------------------------------------------
# Pallas kernel: one LSTM layer, one (batch-tile, time-chunk) grid step.
# The W_ih projection is fused: computed per chunk as one MXU matmul.
# ----------------------------------------------------------------------------
def _lstm_layer_kernel(x_ref, wih_ref, b_ref, whh_ref, h0_ref, c0_ref,
                       out_ref, hT_ref, cT_ref,
                       gx_sc, h_sc, c_sc,
                       *, Hp, Tc, T_real, T_pad):
    _, Bt, In = x_ref.shape
    t_chunk = pl.program_id(1)

    # Initialise the carried state at the first time chunk of each batch tile.
    @pl.when(t_chunk == 0)
    def _():
        h_sc[...] = h0_ref[...]
        c_sc[...] = c0_ref[...]

    # Fused input projection for the whole chunk: one (Tc*Bt, In)x(In, 4Hp)
    # MXU matmul with f32 accumulation, kept in VMEM scratch (no HBM traffic
    # for the f32 pre-activation gates).
    x_chunk = x_ref[...].reshape(Tc * Bt, In)                       # bf16
    gx = jnp.dot(x_chunk, wih_ref[...],
                 preferred_element_type=jnp.float32) + b_ref[...]   # (Tc*Bt, 4Hp) f32
    gx_sc[...] = gx.reshape(Tc, Bt, 4 * Hp)

    # Loop-invariant: hoisted out of the unrolled step body.
    w_hh = whh_ref[...]                                             # (Hp, 4Hp) bf16

    masked = (T_pad != T_real)   # trace-time; Tc is chosen to divide T when possible

    def step(i, carry):
        h, c = carry                                                # (Bt, Hp) f32
        gates = gx_sc[i] + jnp.dot(h.astype(w_hh.dtype), w_hh,
                                   preferred_element_type=jnp.float32)
        # PyTorch gate order [i | f | g | o]; Hp multiple of 128 -> lane-aligned.
        i_g = jax.nn.sigmoid(gates[:, 0 * Hp:1 * Hp])
        f_g = jax.nn.sigmoid(gates[:, 1 * Hp:2 * Hp])
        g_g = jnp.tanh(gates[:, 2 * Hp:3 * Hp])
        o_g = jax.nn.sigmoid(gates[:, 3 * Hp:4 * Hp])
        c_new = f_g * c + i_g * g_g
        h_new = o_g * jnp.tanh(c_new)
        if masked:
            # Only reachable when T % Tc != 0; keeps h_T / c_T exact (padded
            # timesteps have gx == bias, which must not advance the state).
            valid = (t_chunk * Tc + i) < T_real
            h_new = jnp.where(valid, h_new, h)
            c_new = jnp.where(valid, c_new, c)
        out_ref[i] = h_new.astype(out_ref.dtype)
        return h_new, c_new

    if Tc <= 8:
        unroll = True
    elif Hp <= 256:
        unroll = 8
    elif Hp <= 512:
        unroll = 4
    else:
        unroll = 2
    h, c = lax.fori_loop(0, Tc, step, (h_sc[...], c_sc[...]), unroll=unroll)

    h_sc[...] = h
    c_sc[...] = c

    # Final-state writes only on the last time chunk.
    @pl.when(t_chunk == pl.num_programs(1) - 1)
    def _():
        hT_ref[...] = h.astype(hT_ref.dtype)
        cT_ref[...] = c.astype(cT_ref.dtype)


def _lstm_layer(x_tm, w_ih_p, b_p, w_hh_p, h0_p, c0_p,
                *, T_real, Tc, Bt, vmem_cap):
    """One LSTM layer over a padded, time-major bf16 input.

    x_tm   : (T_pad, Bp, In)  bf16   layer input
    w_ih_p : (In, 4Hp)        bf16
    b_p    : (1, 4Hp)         f32    (b_ih + b_hh, gate-padded)
    w_hh_p : (Hp, 4Hp)        bf16
    h0_p   : (Bp, Hp)         f32
    c0_p   : (Bp, Hp)         f32
    returns out (T_pad, Bp, Hp) bf16, h_T (Bp, Hp) f32, c_T (Bp, Hp) f32
    """
    T_pad, Bp, In = x_tm.shape
    Hp = w_hh_p.shape[0]
    NT = T_pad // Tc
    NB = Bp // Bt

    kernel = partial(_lstm_layer_kernel, Hp=Hp, Tc=Tc,
                     T_real=T_real, T_pad=T_pad)

    out_shapes = (
        jax.ShapeDtypeStruct((T_pad, Bp, Hp), jnp.bfloat16),   # inter-layer act
        jax.ShapeDtypeStruct((Bp, Hp), jnp.float32),           # h_T
        jax.ShapeDtypeStruct((Bp, Hp), jnp.float32),           # c_T
    )

    vmem = pltpu.MemorySpace.VMEM
    grid_spec = pltpu.PrefetchScalarGridSpec(
        num_scalar_prefetch=0,
        grid=(NB, NT),
        in_specs=[
            pl.BlockSpec((Tc, Bt, In), lambda b, t: (t, b, 0)),   # x chunk (bf16)
            pl.BlockSpec(memory_space=vmem),                      # W_ih (whole, resident)
            pl.BlockSpec(memory_space=vmem),                      # bias  (whole, resident)
            pl.BlockSpec(memory_space=vmem),                      # W_hh (whole, resident)
            pl.BlockSpec((Bt, Hp), lambda b, t: (b, 0)),          # h0
            pl.BlockSpec((Bt, Hp), lambda b, t: (b, 0)),          # c0
        ],
        out_specs=[
            pl.BlockSpec((Tc, Bt, Hp), lambda b, t: (t, b, 0)),   # out (bf16)
            pl.BlockSpec((Bt, Hp), lambda b, t: (b, 0)),          # h_T
            pl.BlockSpec((Bt, Hp), lambda b, t: (b, 0)),          # c_T
        ],
        scratch_shapes=[
            pltpu.VMEM((Tc, Bt, 4 * Hp), jnp.float32),   # fused-projection gates
            pltpu.VMEM((Bt, Hp), jnp.float32),           # h carry
            pltpu.VMEM((Bt, Hp), jnp.float32),           # c carry
        ],
    )

    # VMEM footprint estimate -> generation-aware scoped limit (~80% of the
    # physical capacity; never the full chip, plenty of compiler headroom).
    est = (2 * Tc * Bt * In * 2          # x blocks (bf16, double-buffered)
           + 2 * Tc * Bt * Hp * 2        # out blocks (bf16, double-buffered)
           + In * 4 * Hp * 2             # W_ih resident
           + Hp * 4 * Hp * 2             # W_hh resident
           + 4 * Hp * 4                  # bias
           + 8 * Bt * Hp * 4             # h0/c0/hT/cT blocks
           + Tc * Bt * 4 * Hp * 4        # gx scratch
           + 2 * Bt * Hp * 4)            # h/c scratch
    cap = max(int(0.8 * vmem_cap), 32 * 1024 * 1024)
    vmem_limit = int(min(max(int(1.5 * est), 32 * 1024 * 1024), cap))

    return pl.pallas_call(
        kernel,
        out_shape=out_shapes,
        grid_spec=grid_spec,
        compiler_params=pltpu.CompilerParams(
            dimension_semantics=("parallel", "arbitrary"),
            vmem_limit_bytes=vmem_limit),
    )(x_tm, w_ih_p, b_p, w_hh_p, h0_p, c0_p)


# ----------------------------------------------------------------------------
# DecoderLSTM module equivalent.
# ----------------------------------------------------------------------------
class DecoderLSTMPallas:
    def __init__(self, input_size, hidden_size, num_layers,
                 bidirectional_encoder=False, key=None,
                 param_dtype=jnp.bfloat16, time_chunk=64):
        self.input_size = input_size
        self.hidden_size = hidden_size
        self.num_layers = num_layers
        self.bidirectional_encoder = bidirectional_encoder
        self.num_directions = 2 if bidirectional_encoder else 1
        self.H = hidden_size * self.num_directions        # nn.LSTM hidden size
        self.Hp = max(128, _round_up(self.H, 128))        # lane-aligned hidden size
        self.param_dtype = param_dtype
        self.time_chunk = time_chunk
        self._is_v7x, self._vmem_cap = _detect_tpu()

        if key is None:
            key = jax.random.PRNGKey(0)

        H, Hp = self.H, self.Hp
        bound = 1.0 / (H ** 0.5)      # PyTorch default init U(-1/sqrt(H), 1/sqrt(H))
        self.params = []
        for layer in range(num_layers):
            in_sz = input_size if layer == 0 else H
            in_sz_p = input_size if layer == 0 else Hp
            key, k1, k2, k3, k4 = jax.random.split(key, 5)
            w_ih = jax.random.uniform(k1, (4 * H, in_sz), jnp.float32, -bound, bound)
            w_hh = jax.random.uniform(k2, (4 * H, H), jnp.float32, -bound, bound)
            b_ih = jax.random.uniform(k3, (4 * H,), jnp.float32, -bound, bound)
            b_hh = jax.random.uniform(k4, (4 * H,), jnp.float32, -bound, bound)

            w_ih_t = w_ih.T.astype(param_dtype)            # (in_sz, 4H) bf16
            w_hh_t = w_hh.T.astype(param_dtype)            # (H, 4H)    bf16
            b = (b_ih + b_hh)[None, :]                     # (1, 4H)    f32

            # Padded, lane-aligned copies used by the Pallas path.
            w_ih_p = _pad_gate_cols(_pad_rows(w_ih_t, in_sz_p), H, Hp)
            w_hh_p = _pad_gate_cols(_pad_rows(w_hh_t, Hp), H, Hp)
            b_p = _pad_gate_cols(b, H, Hp)

            self.params.append({
                "w_ih_t": w_ih_t, "w_hh_t": w_hh_t, "b": b,
                "w_ih_p": w_ih_p, "w_hh_p": w_hh_p, "b_p": b_p,
            })

    def __call__(self, x, hidden):
        """x: (B, T, input_size) batch_first; hidden = (h0, c0).

        If bidirectional_encoder: h0/c0 arrive as
        (num_layers * num_directions, B, hidden_size) and are folded to
        (num_layers, B, hidden_size * 2), mirroring the PyTorch code.
        """
        h0, c0 = hidden
        if self.bidirectional_encoder:
            L, D, hs = self.num_layers, self.num_directions, self.hidden_size
            B0 = h0.shape[-2]
            h0 = h0.reshape(L, D, B0, hs)
            c0 = c0.reshape(L, D, B0, hs)
            h0 = jnp.concatenate((h0[:, 0], h0[:, 1]), axis=2)
            c0 = jnp.concatenate((c0[:, 0], c0[:, 1]), axis=2)

        B, T, _ = x.shape
        H, Hp = self.H, self.Hp

        # Batch: multiple of 8 sublanes.  Batch-tile split only on v7x (2 TCs).
        Bp = max(8, _round_up(B, 8))
        NB = 2 if (self._is_v7x and Bp % 16 == 0 and Bp // 2 >= 8) else 1
        Bt = Bp // NB

        # Time chunk: prefer a divisor of T so the per-step validity mask
        # vanishes at trace time; otherwise pad + mask (correctness-critical).
        Tc = min(T, self.time_chunk)
        if T % Tc != 0:
            for cand in range(Tc, max(Tc // 2, 1) - 1, -1):
                if T % cand == 0:
                    Tc = cand
                    break
        T_pad = _round_up(T, Tc)

        h0_p = jnp.zeros((self.num_layers, Bp, Hp), jnp.float32)
        c0_p = jnp.zeros((self.num_layers, Bp, Hp), jnp.float32)
        h0_p = h0_p.at[:, :B, :H].set(h0.astype(jnp.float32))
        c0_p = c0_p.at[:, :B, :H].set(c0.astype(jnp.float32))

        # Time-major once, padded, bf16; stays that way between layers.
        x_tm = jnp.transpose(x, (1, 0, 2))
        x_tm = jnp.pad(x_tm, ((0, T_pad - T), (0, Bp - B), (0, 0)))
        layer_in = x_tm.astype(self.param_dtype)                 # (T_pad, Bp, In)

        h_finals, c_finals = [], []
        for layer in range(self.num_layers):
            p = self.params[layer]
            out, h_T, c_T = _lstm_layer(layer_in, p["w_ih_p"], p["b_p"],
                                        p["w_hh_p"], h0_p[layer], c0_p[layer],
                                        T_real=T, Tc=Tc, Bt=Bt,
                                        vmem_cap=self._vmem_cap)
            h_finals.append(h_T[:B, :H])
            c_finals.append(c_T[:B, :H])
            layer_in = out               # (T_pad, Bp, Hp) bf16, padded, time-major

        out = jnp.transpose(layer_in[:T, :B, :H], (1, 0, 2)).astype(x.dtype)
        h_n = jnp.stack(h_finals, axis=0).astype(x.dtype)
        c_n = jnp.stack(c_finals, axis=0).astype(x.dtype)
        return out, (h_n, c_n)


# ----------------------------------------------------------------------------
# Pure-JAX reference (same bf16-weight / f32-accumulate math, unpadded).
# ----------------------------------------------------------------------------
def _reference_lstm(model, x, h0, c0):
    H = model.H
    pd = model.param_dtype

    def one_layer(x_tbi, p, h, c):
        def step(carry, x_t):
            h, c = carry
            gates = (jnp.dot(x_t.astype(pd), p["w_ih_t"],
                             preferred_element_type=jnp.float32)
                     + jnp.dot(h.astype(pd), p["w_hh_t"],
                               preferred_element_type=jnp.float32)
                     + p["b"])
            i = jax.nn.sigmoid(gates[:, 0 * H:1 * H])
            f = jax.nn.sigmoid(gates[:, 1 * H:2 * H])
            g = jnp.tanh(gates[:, 2 * H:3 * H])
            o = jax.nn.sigmoid(gates[:, 3 * H:4 * H])
            c = f * c + i * g
            h = o * jnp.tanh(c)
            return (h, c), h
        (h, c), out = lax.scan(step, (h.astype(jnp.float32), c.astype(jnp.float32)),
                               x_tbi)
        return out, h, c

    layer_in = jnp.transpose(x, (1, 0, 2)).astype(jnp.float32)
    hs, cs = [], []
    for layer in range(model.num_layers):
        layer_in, hT, cT = one_layer(layer_in, model.params[layer],
                                     h0[layer], c0[layer])
        hs.append(hT)
        cs.append(cT)
    return jnp.transpose(layer_in, (1, 0, 2)), jnp.stack(hs), jnp.stack(cs)


if __name__ == "__main__":
    B, T = 2, 8
    input_size = 8
    hidden_size = 16
    num_layers = 2
    bidirectional_encoder = True
    num_directions = 2
    H = hidden_size * num_directions                      # 32

    key = jax.random.PRNGKey(0)
    kx, kh, kc, kp = jax.random.split(key, 4)

    x = jax.random.normal(kx, (B, T, input_size), jnp.float32)
    # Encoder-style hidden: (num_layers * num_directions, B, hidden_size)
    h0_enc = jax.random.normal(kh, (num_layers * num_directions, B, hidden_size),
                               jnp.float32)
    c0_enc = jax.random.normal(kc, (num_layers * num_directions, B, hidden_size),
                               jnp.float32)

    model = DecoderLSTMPallas(input_size, hidden_size, num_layers,
                              bidirectional_encoder=bidirectional_encoder, key=kp)

    out, (h_n, c_n) = model(x, (h0_enc, c0_enc))
    out = jax.block_until_ready(out)
    h_n = jax.block_until_ready(h_n)
    c_n = jax.block_until_ready(c_n)

    assert out.shape == (B, T, H)
    assert h_n.shape == (num_layers, B, H)
    assert c_n.shape == (num_layers, B, H)

    # Sanity check against a pure-JAX reference (same folded initial state).
    L, D, hs = num_layers, num_directions, hidden_size
    h0_f = h0_enc.reshape(L, D, B, hs)
    c0_f = c0_enc.reshape(L, D, B, hs)
    h0_f = jnp.concatenate((h0_f[:, 0], h0_f[:, 1]), axis=2)
    c0_f = jnp.concatenate((c0_f[:, 0], c0_f[:, 1]), axis=2)
    ref_out, ref_h, ref_c = _reference_lstm(model, x, h0_f, c0_f)

    assert jnp.allclose(out, ref_out, atol=1e-2, rtol=1e-2)
    assert jnp.allclose(h_n, ref_h, atol=1e-2, rtol=1e-2)
    assert jnp.allclose(c_n, ref_c, atol=1e-2, rtol=1e-2)

    print("KERNEL_OK")
</pallas_src>

<mosaic_0001>
module attributes {stable_mosaic.version = 11 : i64} {
  func.func @_lstm_layer_kernel(%arg0: i32, %arg1: i32, %arg2: memref<8x8x8xbf16, #tpu.memory_space<vmem>>, %arg3: memref<8x512xbf16, #tpu.memory_space<vmem>>, %arg4: memref<1x512xf32, #tpu.memory_space<vmem>>, %arg5: memref<128x512xbf16, #tpu.memory_space<vmem>>, %arg6: memref<8x128xf32, #tpu.memory_space<vmem>>, %arg7: memref<8x128xf32, #tpu.memory_space<vmem>>, %arg8: memref<8x8x128xbf16, #tpu.memory_space<vmem>>, %arg9: memref<8x128xf32, #tpu.memory_space<vmem>>, %arg10: memref<8x128xf32, #tpu.memory_space<vmem>>, %arg11: memref<8x8x512xf32, #tpu.memory_space<vmem>>, %arg12: memref<8x128xf32, #tpu.memory_space<vmem>>, %arg13: memref<8x128xf32, #tpu.memory_space<vmem>>) attributes {dimension_semantics = [#tpu.dimension_semantics<parallel>, #tpu.dimension_semantics<arbitrary>], iteration_bounds = array<i64: 1, 1>, scalar_prefetch = 0 : i64, scratch_operands = 3 : i64, tpu.core_type = #tpu.core_type<tc>, window_params = [{transform_indices = @transform_0, window_bounds = array<i64: 8, 8, 8>}, {pipeline_mode = #tpu.pipeline_mode<synchronous>, transform_indices = @transform_1, window_bounds = array<i64: 8, 512>}, {pipeline_mode = #tpu.pipeline_mode<synchronous>, transform_indices = @transform_2, window_bounds = array<i64: 1, 512>}, {pipeline_mode = #tpu.pipeline_mode<synchronous>, transform_indices = @transform_3, window_bounds = array<i64: 128, 512>}, {transform_indices = @transform_4, window_bounds = array<i64: 8, 128>}, {transform_indices = @transform_5, window_bounds = array<i64: 8, 128>}, {transform_indices = @transform_6, window_bounds = array<i64: 8, 8, 128>}, {transform_indices = @transform_7, window_bounds = array<i64: 8, 128>}, {transform_indices = @transform_8, window_bounds = array<i64: 8, 128>}]} {
    %c0_i32 = arith.constant 0 : i32
    %0 = arith.cmpi eq, %arg1, %c0_i32 : i32
    %1 = arith.extui %0 : i1 to i32
    %c0_i32_0 = arith.constant 0 : i32
    %2 = arith.cmpi ne, %1, %c0_i32_0 : i32
    scf.if %2 {
      %c0_87 = arith.constant 0 : index
      %c0_88 = arith.constant 0 : index
      %308 = vector.load %arg6[%c0_87, %c0_88] : memref<8x128xf32, #tpu.memory_space<vmem>>, vector<8x128xf32>
      %c0_89 = arith.constant 0 : index
      %c0_90 = arith.constant 0 : index
      %309 = vector.load %arg12[%c0_89, %c0_90] : memref<8x128xf32, #tpu.memory_space<vmem>>, vector<8x128xf32>
      tpu.vector_store %arg12[%c0_89, %c0_90], %308 {strides = array<i32>} : memref<8x128xf32, #tpu.memory_space<vmem>>, vector<8x128xf32>,
      %c0_91 = arith.constant 0 : index
      %c0_92 = arith.constant 0 : index
      %310 = vector.load %arg7[%c0_91, %c0_92] : memref<8x128xf32, #tpu.memory_space<vmem>>, vector<8x128xf32>
      %c0_93 = arith.constant 0 : index
      %c0_94 = arith.constant 0 : index
      %311 = vector.load %arg13[%c0_93, %c0_94] : memref<8x128xf32, #tpu.memory_space<vmem>>, vector<8x128xf32>
      tpu.vector_store %arg13[%c0_93, %c0_94], %310 {strides = array<i32>} : memref<8x128xf32, #tpu.memory_space<vmem>>, vector<8x128xf32>,
    } else {
    }
    %c0 = arith.constant 0 : index
    %c0_1 = arith.constant 0 : index
    %c0_2 = arith.constant 0 : index
    %3 = vector.load %arg2[%c0, %c0_1, %c0_2] : memref<8x8x8xbf16, #tpu.memory_space<vmem>>, vector<8x8x8xbf16>
    %4 = vector.shape_cast %3 : vector<8x8x8xbf16> to vector<64x8xbf16>
    %c0_3 = arith.constant 0 : index
    %c0_4 = arith.constant 0 : index
    %5 = vector.load %arg3[%c0_3, %c0_4] : memref<8x512xbf16, #tpu.memory_space<vmem>>, vector<8x512xbf16>
    %cst = arith.constant dense<0.000000e+00> : vector<64x512xf32>
    %6 = tpu.matmul %4, %5, %cst {dimension_numbers = #tpu.dot_dimension_numbers<[1], [0], [0], [1], [0, 0, 1, 1], [], []>} : vector<64x8xbf16>, vector<8x512xbf16>, vector<64x512xf32> -> vector<64x512xf32>
    %c0_5 = arith.constant 0 : index
    %c0_6 = arith.constant 0 : index
    %7 = vector.load %arg4[%c0_5, %c0_6] : memref<1x512xf32, #tpu.memory_space<vmem>>, vector<1x512xf32>
    %8 = vector.broadcast %7 : vector<1x512xf32> to vector<64x512xf32>
    %9 = arith.addf %6, %8 : vector<64x512xf32>
    %10 = vector.shape_cast %9 : vector<64x512xf32> to vector<8x8x512xf32>
    %c0_7 = arith.constant 0 : index
    %c0_8 = arith.constant 0 : index
    %c0_9 = arith.constant 0 : index
    %11 = vector.load %arg11[%c0_7, %c0_8, %c0_9] : memref<8x8x512xf32, #tpu.memory_space<vmem>>, vector<8x8x512xf32>
    tpu.vector_store %arg11[%c0_7, %c0_8, %c0_9], %10 {strides = array<i32>} : memref<8x8x512xf32, #tpu.memory_space<vmem>>, vector<8x8x512xf32>,
    %c0_10 = arith.constant 0 : index
    %c0_11 = arith.constant 0 : index
    %12 = vector.load %arg5[%c0_10, %c0_11] : memref<128x512xbf16, #tpu.memory_space<vmem>>, vector<128x512xbf16>
    %c0_12 = arith.constant 0 : index
    %c0_13 = arith.constant 0 : index
    %13 = vector.load %arg12[%c0_12, %c0_13] : memref<8x128xf32, #tpu.memory_space<vmem>>, vector<8x128xf32>
    %c0_14 = arith.constant 0 : index
    %c0_15 = arith.constant 0 : index
    %14 = vector.load %arg13[%c0_14, %c0_15] : memref<8x128xf32, #tpu.memory_space<vmem>>, vector<8x128xf32>
    %c0_i32_16 = arith.constant 0 : i32
    %15 = arith.index_cast %c0_i32_16 : i32 to index
    %c0_17 = arith.constant 0 : index
    %c0_18 = arith.constant 0 : index
    %16 = vector.load %arg11[%15, %c0_17, %c0_18] : memref<8x8x512xf32, #tpu.memory_space<vmem>>, vector<1x8x512xf32>
    %17 = vector.shape_cast %16 : vector<1x8x512xf32> to vector<8x512xf32>
    %18 = arith.truncf %13 : vector<8x128xf32> to vector<8x128xbf16>
    %cst_19 = arith.constant dense<0.000000e+00> : vector<8x512xf32>
    %19 = tpu.matmul %18, %12, %cst_19 {dimension_numbers = #tpu.dot_dimension_numbers<[1], [0], [0], [1], [0, 0, 1, 1], [], []>} : vector<8x128xbf16>, vector<128x512xbf16>, vector<8x512xf32> -> vector<8x512xf32>
    %20 = arith.addf %17, %19 : vector<8x512xf32>
    %21 = vector.extract_strided_slice %20 {offsets = [0, 0], sizes = [8, 128], strides = [1, 1]} : vector<8x512xf32> to vector<8x128xf32>
    %22 = arith.negf %21 : vector<8x128xf32>
    %23 = math.exp %22 : vector<8x128xf32>
    %cst_20 = arith.constant 1.000000e+00 : f32
    %24 = vector.broadcast %cst_20 : f32 to vector<8x128xf32>
    %25 = arith.addf %24, %23 : vector<8x128xf32>
    %26 = arith.divf %24, %25 : vector<8x128xf32>
    %27 = vector.extract_strided_slice %20 {offsets = [0, 128], sizes = [8, 128], strides = [1, 1]} : vector<8x512xf32> to vector<8x128xf32>
    %28 = arith.negf %27 : vector<8x128xf32>
    %29 = math.exp %28 : vector<8x128xf32>
    %cst_21 = arith.constant 1.000000e+00 : f32
    %30 = vector.broadcast %cst_21 : f32 to vector<8x128xf32>
    %31 = arith.addf %30, %29 : vector<8x128xf32>
    %32 = arith.divf %30, %31 : vector<8x128xf32>
    %33 = vector.extract_strided_slice %20 {offsets = [0, 256], sizes = [8, 128], strides = [1, 1]} : vector<8x512xf32> to vector<8x128xf32>
    %34 = math.tanh %33 : vector<8x128xf32>
    %35 = vector.extract_strided_slice %20 {offsets = [0, 384], sizes = [8, 128], strides = [1, 1]} : vector<8x512xf32> to vector<8x128xf32>
    %36 = arith.negf %35 : vector<8x128xf32>
    %37 = math.exp %36 : vector<8x128xf32>
    %cst_22 = arith.constant 1.000000e+00 : f32
    %38 = vector.broadcast %cst_22 : f32 to vector<8x128xf32>
    %39 = arith.addf %38, %37 : vector<8x128xf32>
    %40 = arith.divf %38, %39 : vector<8x128xf32>
    %41 = arith.mulf %32, %14 : vector<8x128xf32>
    %42 = arith.mulf %26, %34 : vector<8x128xf32>
    %43 = arith.addf %41, %42 : vector<8x128xf32>
    %44 = math.tanh %43 : vector<8x128xf32>
    %45 = arith.mulf %40, %44 : vector<8x128xf32>
    %46 = arith.truncf %45 : vector<8x128xf32> to vector<8x128xbf16>
    %47 = arith.index_cast %c0_i32_16 : i32 to index
    %c0_23 = arith.constant 0 : index
    %c0_24 = arith.constant 0 : index
    %48 = vector.load %arg8[%47, %c0_23, %c0_24] : memref<8x8x128xbf16, #tpu.memory_space<vmem>>, vector<1x8x128xbf16>
    %49 = vector.shape_cast %48 : vector<1x8x128xbf16> to vector<8x128xbf16>
    %50 = vector.shape_cast %46 : vector<8x128xbf16> to vector<1x8x128xbf16>
    tpu.vector_store %arg8[%47, %c0_23, %c0_24], %50 {strides = array<i32>} : memref<8x8x128xbf16, #tpu.memory_space<vmem>>, vector<1x8x128xbf16>,
    %c1_i32 = arith.constant 1 : i32
    %51 = arith.index_cast %c1_i32 : i32 to index
    %c0_25 = arith.constant 0 : index
    %c0_26 = arith.constant 0 : index
    %52 = vector.load %arg11[%51, %c0_25, %c0_26] : memref<8x8x512xf32, #tpu.memory_space<vmem>>, vector<1x8x512xf32>
    %53 = vector.shape_cast %52 : vector<1x8x512xf32> to vector<8x512xf32>
    %54 = arith.truncf %45 : vector<8x128xf32> to vector<8x128xbf16>
    %cst_27 = arith.constant dense<0.000000e+00> : vector<8x512xf32>
    %55 = tpu.matmul %54, %12, %cst_27 {dimension_numbers = #tpu.dot_dimension_numbers<[1], [0], [0], [1], [0, 0, 1, 1], [], []>} : vector<8x128xbf16>, vector<128x512xbf16>, vector<8x512xf32> -> vector<8x512xf32>
    %56 = arith.addf %53, %55 : vector<8x512xf32>
    %57 = vector.extract_strided_slice %56 {offsets = [0, 0], sizes = [8, 128], strides = [1, 1]} : vector<8x512xf32> to vector<8x128xf32>
    %58 = arith.negf %57 : vector<8x128xf32>
    %59 = math.exp %58 : vector<8x128xf32>
    %cst_28 = arith.constant 1.000000e+00 : f32
    %60 = vector.broadcast %cst_28 : f32 to vector<8x128xf32>
    %61 = arith.addf %60, %59 : vector<8x128xf32>
    %62 = arith.divf %60, %61 : vector<8x128xf32>
    %63 = vector.extract_strided_slice %56 {offsets = [0, 128], sizes = [8, 128], strides = [1, 1]} : vector<8x512xf32> to vector<8x128xf32>
    %64 = arith.negf %63 : vector<8x128xf32>
    %65 = math.exp %64 : vector<8x128xf32>
    %cst_29 = arith.constant 1.000000e+00 : f32
    %66 = vector.broadcast %cst_29 : f32 to vector<8x128xf32>
    %67 = arith.addf %66, %65 : vector<8x128xf32>
    %68 = arith.divf %66, %67 : vector<8x128xf32>
    %69 = vector.extract_strided_slice %56 {offsets = [0, 256], sizes = [8, 128], strides = [1, 1]} : vector<8x512xf32> to vector<8x128xf32>
    %70 = math.tanh %69 : vector<8x128xf32>
    %71 = vector.extract_strided_slice %56 {offsets = [0, 384], sizes = [8, 128], strides = [1, 1]} : vector<8x512xf32> to vector<8x128xf32>
    %72 = arith.negf %71 : vector<8x128xf32>
    %73 = math.exp %72 : vector<8x128xf32>
    %cst_30 = arith.constant 1.000000e+00 : f32
    %74 = vector.broadcast %cst_30 : f32 to vector<8x128xf32>
    %75 = arith.addf %74, %73 : vector<8x128xf32>
    %76 = arith.divf %74, %75 : vector<8x128xf32>
    %77 = arith.mulf %68, %43 : vector<8x128xf32>
    %78 = arith.mulf %62, %70 : vector<8x128xf32>
    %79 = arith.addf %77, %78 : vector<8x128xf32>
    %80 = math.tanh %79 : vector<8x128xf32>
    %81 = arith.mulf %76, %80 : vector<8x128xf32>
    %82 = arith.truncf %81 : vector<8x128xf32> to vector<8x128xbf16>
    %83 = arith.index_cast %c1_i32 : i32 to index
    %c0_31 = arith.constant 0 : index
    %c0_32 = arith.constant 0 : index
    %84 = vector.load %arg8[%83, %c0_31, %c0_32] : memref<8x8x128xbf16, #tpu.memory_space<vmem>>, vector<1x8x128xbf16>
    %85 = vector.shape_cast %84 : vector<1x8x128xbf16> to vector<8x128xbf16>
    %86 = vector.shape_cast %82 : vector<8x128xbf16> to vector<1x8x128xbf16>
    tpu.vector_store %arg8[%83, %c0_31, %c0_32], %86 {strides = array<i32>} : memref<8x8x128xbf16, #tpu.memory_space<vmem>>, vector<1x8x128xbf16>,
    %c2_i32 = arith.constant 2 : i32
    %87 = arith.index_cast %c2_i32 : i32 to index
    %c0_33 = arith.constant 0 : index
    %c0_34 = arith.constant 0 : index
    %88 = vector.load %arg11[%87, %c0_33, %c0_34] : memref<8x8x512xf32, #tpu.memory_space<vmem>>, vector<1x8x512xf32>
    %89 = vector.shape_cast %88 : vector<1x8x512xf32> to vector<8x512xf32>
    %90 = arith.truncf %81 : vector<8x128xf32> to vector<8x128xbf16>
    %cst_35 = arith.constant dense<0.000000e+00> : vector<8x512xf32>
    %91 = tpu.matmul %90, %12, %cst_35 {dimension_numbers = #tpu.dot_dimension_numbers<[1], [0], [0], [1], [0, 0, 1, 1], [], []>} : vector<8x128xbf16>, vector<128x512xbf16>, vector<8x512xf32> -> vector<8x512xf32>
    %92 = arith.addf %89, %91 : vector<8x512xf32>
    %93 = vector.extract_strided_slice %92 {offsets = [0, 0], sizes = [8, 128], strides = [1, 1]} : vector<8x512xf32> to vector<8x128xf32>
    %94 = arith.negf %93 : vector<8x128xf32>
    %95 = math.exp %94 : vector<8x128xf32>
    %cst_36 = arith.constant 1.000000e+00 : f32
    %96 = vector.broadcast %cst_36 : f32 to vector<8x128xf32>
    %97 = arith.addf %96, %95 : vector<8x128xf32>
    %98 = arith.divf %96, %97 : vector<8x128xf32>
    %99 = vector.extract_strided_slice %92 {offsets = [0, 128], sizes = [8, 128], strides = [1, 1]} : vector<8x512xf32> to vector<8x128xf32>
    %100 = arith.negf %99 : vector<8x128xf32>
    %101 = math.exp %100 : vector<8x128xf32>
    %cst_37 = arith.constant 1.000000e+00 : f32
    %102 = vector.broadcast %cst_37 : f32 to vector<8x128xf32>
    %103 = arith.addf %102, %101 : vector<8x128xf32>
    %104 = arith.divf %102, %103 : vector<8x128xf32>
    %105 = vector.extract_strided_slice %92 {offsets = [0, 256], sizes = [8, 128], strides = [1, 1]} : vector<8x512xf32> to vector<8x128xf32>
    %106 = math.tanh %105 : vector<8x128xf32>
    %107 = vector.extract_strided_slice %92 {offsets = [0, 384], sizes = [8, 128], strides = [1, 1]} : vector<8x512xf32> to vector<8x128xf32>
    %108 = arith.negf %107 : vector<8x128xf32>
    %109 = math.exp %108 : vector<8x128xf32>
    %cst_38 = arith.constant 1.000000e+00 : f32
    %110 = vector.broadcast %cst_38 : f32 to vector<8x128xf32>
    %111 = arith.addf %110, %109 : vector<8x128xf32>
    %112 = arith.divf %110, %111 : vector<8x128xf32>
    %113 = arith.mulf %104, %79 : vector<8x128xf32>
    %114 = arith.mulf %98, %106 : vector<8x128xf32>
    %115 = arith.addf %113, %114 : vector<8x128xf32>
    %116 = math.tanh %115 : vector<8x128xf32>
    %117 = arith.mulf %112, %116 : vector<8x128xf32>
    %118 = arith.truncf %117 : vector<8x128xf32> to vector<8x128xbf16>
    %119 = arith.index_cast %c2_i32 : i32 to index
    %c0_39 = arith.constant 0 : index
    %c0_40 = arith.constant 0 : index
    %120 = vector.load %arg8[%119, %c0_39, %c0_40] : memref<8x8x128xbf16, #tpu.memory_space<vmem>>, vector<1x8x128xbf16>
    %121 = vector.shape_cast %120 : vector<1x8x128xbf16> to vector<8x128xbf16>
    %122 = vector.shape_cast %118 : vector<8x128xbf16> to vector<1x8x128xbf16>
    tpu.vector_store %arg8[%119, %c0_39, %c0_40], %122 {strides = array<i32>} : memref<8x8x128xbf16, #tpu.memory_space<vmem>>, vector<1x8x128xbf16>,
    %c3_i32 = arith.constant 3 : i32
    %123 = arith.index_cast %c3_i32 : i32 to index
    %c0_41 = arith.constant 0 : index
    %c0_42 = arith.constant 0 : index
    %124 = vector.load %arg11[%123, %c0_41, %c0_42] : memref<8x8x512xf32, #tpu.memory_space<vmem>>, vector<1x8x512xf32>
    %125 = vector.shape_cast %124 : vector<1x8x512xf32> to vector<8x512xf32>
    %126 = arith.truncf %117 : vector<8x128xf32> to vector<8x128xbf16>
    %cst_43 = arith.constant dense<0.000000e+00> : vector<8x512xf32>
    %127 = tpu.matmul %126, %12, %cst_43 {dimension_numbers = #tpu.dot_dimension_numbers<[1], [0], [0], [1], [0, 0, 1, 1], [], []>} : vector<8x128xbf16>, vector<128x512xbf16>, vector<8x512xf32> -> vector<8x512xf32>
    %128 = arith.addf %125, %127 : vector<8x512xf32>
    %129 = vector.extract_strided_slice %128 {offsets = [0, 0], sizes = [8, 128], strides = [1, 1]} : vector<8x512xf32> to vector<8x128xf32>
    %130 = arith.negf %129 : vector<8x128xf32>
    %131 = math.exp %130 : vector<8x128xf32>
    %cst_44 = arith.constant 1.000000e+00 : f32
    %132 = vector.broadcast %cst_44 : f32 to vector<8x128xf32>
    %133 = arith.addf %132, %131 : vector<8x128xf32>
    %134 = arith.divf %132, %133 : vector<8x128xf32>
    %135 = vector.extract_strided_slice %128 {offsets = [0, 128], sizes = [8, 128], strides = [1, 1]} : vector<8x512xf32> to vector<8x128xf32>
    %136 = arith.negf %135 : vector<8x128xf32>
    %137 = math.exp %136 : vector<8x128xf32>
    %cst_45 = arith.constant 1.000000e+00 : f32
    %138 = vector.broadcast %cst_45 : f32 to vector<8x128xf32>
    %139 = arith.addf %138, %137 : vector<8x128xf32>
    %140 = arith.divf %138, %139 : vector<8x128xf32>
    %141 = vector.extract_strided_slice %128 {offsets = [0, 256], sizes = [8, 128], strides = [1, 1]} : vector<8x512xf32> to vector<8x128xf32>
    %142 = math.tanh %141 : vector<8x128xf32>
    %143 = vector.extract_strided_slice %128 {offsets = [0, 384], sizes = [8, 128], strides = [1, 1]} : vector<8x512xf32> to vector<8x128xf32>
    %144 = arith.negf %143 : vector<8x128xf32>
    %145 = math.exp %144 : vector<8x128xf32>
    %cst_46 = arith.constant 1.000000e+00 : f32
    %146 = vector.broadcast %cst_46 : f32 to vector<8x128xf32>
    %147 = arith.addf %146, %145 : vector<8x128xf32>
    %148 = arith.divf %146, %147 : vector<8x128xf32>
    %149 = arith.mulf %140, %115 : vector<8x128xf32>
    %150 = arith.mulf %134, %142 : vector<8x128xf32>
    %151 = arith.addf %149, %150 : vector<8x128xf32>
    %152 = math.tanh %151 : vector<8x128xf32>
    %153 = arith.mulf %148, %152 : vector<8x128xf32>
    %154 = arith.truncf %153 : vector<8x128xf32> to vector<8x128xbf16>
    %155 = arith.index_cast %c3_i32 : i32 to index
    %c0_47 = arith.constant 0 : index
    %c0_48 = arith.constant 0 : index
    %156 = vector.load %arg8[%155, %c0_47, %c0_48] : memref<8x8x128xbf16, #tpu.memory_space<vmem>>, vector<1x8x128xbf16>
    %157 = vector.shape_cast %156 : vector<1x8x128xbf16> to vector<8x128xbf16>
    %158 = vector.shape_cast %154 : vector<8x128xbf16> to vector<1x8x128xbf16>
    tpu.vector_store %arg8[%155, %c0_47, %c0_48], %158 {strides = array<i32>} : memref<8x8x128xbf16, #tpu.memory_space<vmem>>, vector<1x8x128xbf16>,
    %c4_i32 = arith.constant 4 : i32
    %159 = arith.index_cast %c4_i32 : i32 to index
    %c0_49 = arith.constant 0 : index
    %c0_50 = arith.constant 0 : index
    %160 = vector.load %arg11[%159, %c0_49, %c0_50] : memref<8x8x512xf32, #tpu.memory_space<vmem>>, vector<1x8x512xf32>
    %161 = vector.shape_cast %160 : vector<1x8x512xf32> to vector<8x512xf32>
    %162 = arith.truncf %153 : vector<8x128xf32> to vector<8x128xbf16>
    %cst_51 = arith.constant dense<0.000000e+00> : vector<8x512xf32>
    %163 = tpu.matmul %162, %12, %cst_51 {dimension_numbers = #tpu.dot_dimension_numbers<[1], [0], [0], [1], [0, 0, 1, 1], [], []>} : vector<8x128xbf16>, vector<128x512xbf16>, vector<8x512xf32> -> vector<8x512xf32>
    %164 = arith.addf %161, %163 : vector<8x512xf32>
    %165 = vector.extract_strided_slice %164 {offsets = [0, 0], sizes = [8, 128], strides = [1, 1]} : vector<8x512xf32> to vector<8x128xf32>
    %166 = arith.negf %165 : vector<8x128xf32>
    %167 = math.exp %166 : vector<8x128xf32>
    %cst_52 = arith.constant 1.000000e+00 : f32
    %168 = vector.broadcast %cst_52 : f32 to vector<8x128xf32>
    %169 = arith.addf %168, %167 : vector<8x128xf32>
    %170 = arith.divf %168, %169 : vector<8x128xf32>
    %171 = vector.extract_strided_slice %164 {offsets = [0, 128], sizes = [8, 128], strides = [1, 1]} : vector<8x512xf32> to vector<8x128xf32>
    %172 = arith.negf %171 : vector<8x128xf32>
    %173 = math.exp %172 : vector<8x128xf32>
    %cst_53 = arith.constant 1.000000e+00 : f32
    %174 = vector.broadcast %cst_53 : f32 to vector<8x128xf32>
    %175 = arith.addf %174, %173 : vector<8x128xf32>
    %176 = arith.divf %174, %175 : vector<8x128xf32>
    %177 = vector.extract_strided_slice %164 {offsets = [0, 256], sizes = [8, 128], strides = [1, 1]} : vector<8x512xf32> to vector<8x128xf32>
    %178 = math.tanh %177 : vector<8x128xf32>
    %179 = vector.extract_strided_slice %164 {offsets = [0, 384], sizes = [8, 128], strides = [1, 1]} : vector<8x512xf32> to vector<8x128xf32>
    %180 = arith.negf %179 : vector<8x128xf32>
    %181 = math.exp %180 : vector<8x128xf32>
    %cst_54 = arith.constant 1.000000e+00 : f32
    %182 = vector.broadcast %cst_54 : f32 to vector<8x128xf32>
    %183 = arith.addf %182, %181 : vector<8x128xf32>
    %184 = arith.divf %182, %183 : vector<8x128xf32>
    %185 = arith.mulf %176, %151 : vector<8x128xf32>
    %186 = arith.mulf %170, %178 : vector<8x128xf32>
    %187 = arith.addf %185, %186 : vector<8x128xf32>
    %188 = math.tanh %187 : vector<8x128xf32>
    %189 = arith.mulf %184, %188 : vector<8x128xf32>
    %190 = arith.truncf %189 : vector<8x128xf32> to vector<8x128xbf16>
    %191 = arith.index_cast %c4_i32 : i32 to index
    %c0_55 = arith.constant 0 : index
    %c0_56 = arith.constant 0 : index
    %192 = vector.load %arg8[%191, %c0_55, %c0_56] : memref<8x8x128xbf16, #tpu.memory_space<vmem>>, vector<1x8x128xbf16>
    %193 = vector.shape_cast %192 : vector<1x8x128xbf16> to vector<8x128xbf16>
    %194 = vector.shape_cast %190 : vector<8x128xbf16> to vector<1x8x128xbf16>
    tpu.vector_store %arg8[%191, %c0_55, %c0_56], %194 {strides = array<i32>} : memref<8x8x128xbf16, #tpu.memory_space<vmem>>, vector<1x8x128xbf16>,
    %c5_i32 = arith.constant 5 : i32
    %195 = arith.index_cast %c5_i32 : i32 to index
    %c0_57 = arith.constant 0 : index
    %c0_58 = arith.constant 0 : index
    %196 = vector.load %arg11[%195, %c0_57, %c0_58] : memref<8x8x512xf32, #tpu.memory_space<vmem>>, vector<1x8x512xf32>
    %197 = vector.shape_cast %196 : vector<1x8x512xf32> to vector<8x512xf32>
    %198 = arith.truncf %189 : vector<8x128xf32> to vector<8x128xbf16>
    %cst_59 = arith.constant dense<0.000000e+00> : vector<8x512xf32>
    %199 = tpu.matmul %198, %12, %cst_59 {dimension_numbers = #tpu.dot_dimension_numbers<[1], [0], [0], [1], [0, 0, 1, 1], [], []>} : vector<8x128xbf16>, vector<128x512xbf16>, vector<8x512xf32> -> vector<8x512xf32>
    %200 = arith.addf %197, %199 : vector<8x512xf32>
    %201 = vector.extract_strided_slice %200 {offsets = [0, 0], sizes = [8, 128], strides = [1, 1]} : vector<8x512xf32> to vector<8x128xf32>
    %202 = arith.negf %201 : vector<8x128xf32>
    %203 = math.exp %202 : vector<8x128xf32>
    %cst_60 = arith.constant 1.000000e+00 : f32
    %204 = vector.broadcast %cst_60 : f32 to vector<8x128xf32>
    %205 = arith.addf %204, %203 : vector<8x128xf32>
    %206 = arith.divf %204, %205 : vector<8x128xf32>
    %207 = vector.extract_strided_slice %200 {offsets = [0, 128], sizes = [8, 128], strides = [1, 1]} : vector<8x512xf32> to vector<8x128xf32>
    %208 = arith.negf %207 : vector<8x128xf32>
    %209 = math.exp %208 : vector<8x128xf32>
    %cst_61 = arith.constant 1.000000e+00 : f32
    %210 = vector.broadcast %cst_61 : f32 to vector<8x128xf32>
    %211 = arith.addf %210, %209 : vector<8x128xf32>
    %212 = arith.divf %210, %211 : vector<8x128xf32>
    %213 = vector.extract_strided_slice %200 {offsets = [0, 256], sizes = [8, 128], strides = [1, 1]} : vector<8x512xf32> to vector<8x128xf32>
    %214 = math.tanh %213 : vector<8x128xf32>
    %215 = vector.extract_strided_slice %200 {offsets = [0, 384], sizes = [8, 128], strides = [1, 1]} : vector<8x512xf32> to vector<8x128xf32>
    %216 = arith.negf %215 : vector<8x128xf32>
    %217 = math.exp %216 : vector<8x128xf32>
    %cst_62 = arith.constant 1.000000e+00 : f32
    %218 = vector.broadcast %cst_62 : f32 to vector<8x128xf32>
    %219 = arith.addf %218, %217 : vector<8x128xf32>
    %220 = arith.divf %218, %219 : vector<8x128xf32>
    %221 = arith.mulf %212, %187 : vector<8x128xf32>
    %222 = arith.mulf %206, %214 : vector<8x128xf32>
    %223 = arith.addf %221, %222 : vector<8x128xf32>
    %224 = math.tanh %223 : vector<8x128xf32>
    %225 = arith.mulf %220, %224 : vector<8x128xf32>
    %226 = arith.truncf %225 : vector<8x128xf32> to vector<8x128xbf16>
    %227 = arith.index_cast %c5_i32 : i32 to index
    %c0_63 = arith.constant 0 : index
    %c0_64 = arith.constant 0 : index
    %228 = vector.load %arg8[%227, %c0_63, %c0_64] : memref<8x8x128xbf16, #tpu.memory_space<vmem>>, vector<1x8x128xbf16>
    %229 = vector.shape_cast %228 : vector<1x8x128xbf16> to vector<8x128xbf16>
    %230 = vector.shape_cast %226 : vector<8x128xbf16> to vector<1x8x128xbf16>
    tpu.vector_store %arg8[%227, %c0_63, %c0_64], %230 {strides = array<i32>} : memref<8x8x128xbf16, #tpu.memory_space<vmem>>, vector<1x8x128xbf16>,
    %c6_i32 = arith.constant 6 : i32
    %231 = arith.index_cast %c6_i32 : i32 to index
    %c0_65 = arith.constant 0 : index
    %c0_66 = arith.constant 0 : index
    %232 = vector.load %arg11[%231, %c0_65, %c0_66] : memref<8x8x512xf32, #tpu.memory_space<vmem>>, vector<1x8x512xf32>
    %233 = vector.shape_cast %232 : vector<1x8x512xf32> to vector<8x512xf32>
    %234 = arith.truncf %225 : vector<8x128xf32> to vector<8x128xbf16>
    %cst_67 = arith.constant dense<0.000000e+00> : vector<8x512xf32>
    %235 = tpu.matmul %234, %12, %cst_67 {dimension_numbers = #tpu.dot_dimension_numbers<[1], [0], [0], [1], [0, 0, 1, 1], [], []>} : vector<8x128xbf16>, vector<128x512xbf16>, vector<8x512xf32> -> vector<8x512xf32>
    %236 = arith.addf %233, %235 : vector<8x512xf32>
    %237 = vector.extract_strided_slice %236 {offsets = [0, 0], sizes = [8, 128], strides = [1, 1]} : vector<8x512xf32> to vector<8x128xf32>
    %238 = arith.negf %237 : vector<8x128xf32>
    %239 = math.exp %238 : vector<8x128xf32>
    %cst_68 = arith.constant 1.000000e+00 : f32
    %240 = vector.broadcast %cst_68 : f32 to vector<8x128xf32>
    %241 = arith.addf %240, %239 : vector<8x128xf32>
    %242 = arith.divf %240, %241 : vector<8x128xf32>
    %243 = vector.extract_strided_slice %236 {offsets = [0, 128], sizes = [8, 128], strides = [1, 1]} : vector<8x512xf32> to vector<8x128xf32>
    %244 = arith.negf %243 : vector<8x128xf32>
    %245 = math.exp %244 : vector<8x128xf32>
    %cst_69 = arith.constant 1.000000e+00 : f32
    %246 = vector.broadcast %cst_69 : f32 to vector<8x128xf32>
    %247 = arith.addf %246, %245 : vector<8x128xf32>
    %248 = arith.divf %246, %247 : vector<8x128xf32>
    %249 = vector.extract_strided_slice %236 {offsets = [0, 256], sizes = [8, 128], strides = [1, 1]} : vector<8x512xf32> to vector<8x128xf32>
    %250 = math.tanh %249 : vector<8x128xf32>
    %251 = vector.extract_strided_slice %236 {offsets = [0, 384], sizes = [8, 128], strides = [1, 1]} : vector<8x512xf32> to vector<8x128xf32>
    %252 = arith.negf %251 : vector<8x128xf32>
    %253 = math.exp %252 : vector<8x128xf32>
    %cst_70 = arith.constant 1.000000e+00 : f32
    %254 = vector.broadcast %cst_70 : f32 to vector<8x128xf32>
    %255 = arith.addf %254, %253 : vector<8x128xf32>
    %256 = arith.divf %254, %255 : vector<8x128xf32>
    %257 = arith.mulf %248, %223 : vector<8x128xf32>
    %258 = arith.mulf %242, %250 : vector<8x128xf32>
    %259 = arith.addf %257, %258 : vector<8x128xf32>
    %260 = math.tanh %259 : vector<8x128xf32>
    %261 = arith.mulf %256, %260 : vector<8x128xf32>
    %262 = arith.truncf %261 : vector<8x128xf32> to vector<8x128xbf16>
    %263 = arith.index_cast %c6_i32 : i32 to index
    %c0_71 = arith.constant 0 : index
    %c0_72 = arith.constant 0 : index
    %264 = vector.load %arg8[%263, %c0_71, %c0_72] : memref<8x8x128xbf16, #tpu.memory_space<vmem>>, vector<1x8x128xbf16>
    %265 = vector.shape_cast %264 : vector<1x8x128xbf16> to vector<8x128xbf16>
    %266 = vector.shape_cast %262 : vector<8x128xbf16> to vector<1x8x128xbf16>
    tpu.vector_store %arg8[%263, %c0_71, %c0_72], %266 {strides = array<i32>} : memref<8x8x128xbf16, #tpu.memory_space<vmem>>, vector<1x8x128xbf16>,
    %c7_i32 = arith.constant 7 : i32
    %267 = arith.index_cast %c7_i32 : i32 to index
    %c0_73 = arith.constant 0 : index
    %c0_74 = arith.constant 0 : index
    %268 = vector.load %arg11[%267, %c0_73, %c0_74] : memref<8x8x512xf32, #tpu.memory_space<vmem>>, vector<1x8x512xf32>
    %269 = vector.shape_cast %268 : vector<1x8x512xf32> to vector<8x512xf32>
    %270 = arith.truncf %261 : vector<8x128xf32> to vector<8x128xbf16>
    %cst_75 = arith.constant dense<0.000000e+00> : vector<8x512xf32>
    %271 = tpu.matmul %270, %12, %cst_75 {dimension_numbers = #tpu.dot_dimension_numbers<[1], [0], [0], [1], [0, 0, 1, 1], [], []>} : vector<8x128xbf16>, vector<128x512xbf16>, vector<8x512xf32> -> vector<8x512xf32>
    %272 = arith.addf %269, %271 : vector<8x512xf32>
    %273 = vector.extract_strided_slice %272 {offsets = [0, 0], sizes = [8, 128], strides = [1, 1]} : vector<8x512xf32> to vector<8x128xf32>
    %274 = arith.negf %273 : vector<8x128xf32>
    %275 = math.exp %274 : vector<8x128xf32>
    %cst_76 = arith.constant 1.000000e+00 : f32
    %276 = vector.broadcast %cst_76 : f32 to vector<8x128xf32>
    %277 = arith.addf %276, %275 : vector<8x128xf32>
    %278 = arith.divf %276, %277 : vector<8x128xf32>
    %279 = vector.extract_strided_slice %272 {offsets = [0, 128], sizes = [8, 128], strides = [1, 1]} : vector<8x512xf32> to vector<8x128xf32>
    %280 = arith.negf %279 : vector<8x128xf32>
    %281 = math.exp %280 : vector<8x128xf32>
    %cst_77 = arith.constant 1.000000e+00 : f32
    %282 = vector.broadcast %cst_77 : f32 to vector<8x128xf32>
    %283 = arith.addf %282, %281 : vector<8x128xf32>
    %284 = arith.divf %282, %283 : vector<8x128xf32>
    %285 = vector.extract_strided_slice %272 {offsets = [0, 256], sizes = [8, 128], strides = [1, 1]} : vector<8x512xf32> to vector<8x128xf32>
    %286 = math.tanh %285 : vector<8x128xf32>
    %287 = vector.extract_strided_slice %272 {offsets = [0, 384], sizes = [8, 128], strides = [1, 1]} : vector<8x512xf32> to vector<8x128xf32>
    %288 = arith.negf %287 : vector<8x128xf32>
    %289 = math.exp %288 : vector<8x128xf32>
    %cst_78 = arith.constant 1.000000e+00 : f32
    %290 = vector.broadcast %cst_78 : f32 to vector<8x128xf32>
    %291 = arith.addf %290, %289 : vector<8x128xf32>
    %292 = arith.divf %290, %291 : vector<8x128xf32>
    %293 = arith.mulf %284, %259 : vector<8x128xf32>
    %294 = arith.mulf %278, %286 : vector<8x128xf32>
    %295 = arith.addf %293, %294 : vector<8x128xf32>
    %296 = math.tanh %295 : vector<8x128xf32>
    %297 = arith.mulf %292, %296 : vector<8x128xf32>
    %298 = arith.truncf %297 : vector<8x128xf32> to vector<8x128xbf16>
    %299 = arith.index_cast %c7_i32 : i32 to index
    %c0_79 = arith.constant 0 : index
    %c0_80 = arith.constant 0 : index
    %300 = vector.load %arg8[%299, %c0_79, %c0_80] : memref<8x8x128xbf16, #tpu.memory_space<vmem>>, vector<1x8x128xbf16>
    %301 = vector.shape_cast %300 : vector<1x8x128xbf16> to vector<8x128xbf16>
    %302 = vector.shape_cast %298 : vector<8x128xbf16> to vector<1x8x128xbf16>
    tpu.vector_store %arg8[%299, %c0_79, %c0_80], %302 {strides = array<i32>} : memref<8x8x128xbf16, #tpu.memory_space<vmem>>, vector<1x8x128xbf16>,
    %c8_i32 = arith.constant 8 : i32
    %c0_81 = arith.constant 0 : index
    %c0_82 = arith.constant 0 : index
    %303 = vector.load %arg12[%c0_81, %c0_82] : memref<8x128xf32, #tpu.memory_space<vmem>>, vector<8x128xf32>
    tpu.vector_store %arg12[%c0_81, %c0_82], %297 {strides = array<i32>} : memref<8x128xf32, #tpu.memory_space<vmem>>, vector<8x128xf32>,
    %c0_83 = arith.constant 0 : index
    %c0_84 = arith.constant 0 : index
    %304 = vector.load %arg13[%c0_83, %c0_84] : memref<8x128xf32, #tpu.memory_space<vmem>>, vector<8x128xf32>
    tpu.vector_store %arg13[%c0_83, %c0_84], %295 {strides = array<i32>} : memref<8x128xf32, #tpu.memory_space<vmem>>, vector<8x128xf32>,
    %c0_i32_85 = arith.constant 0 : i32
    %305 = arith.cmpi eq, %arg1, %c0_i32_85 : i32
    %306 = arith.extui %305 : i1 to i32
    %c0_i32_86 = arith.constant 0 : i32
    %307 = arith.cmpi ne, %306, %c0_i32_86 : i32
    scf.if %307 {
      %c0_87 = arith.constant 0 : index
      %c0_88 = arith.constant 0 : index
      %308 = vector.load %arg9[%c0_87, %c0_88] : memref<8x128xf32, #tpu.memory_space<vmem>>, vector<8x128xf32>
      tpu.vector_store %arg9[%c0_87, %c0_88], %297 {strides = array<i32>} : memref<8x128xf32, #tpu.memory_space<vmem>>, vector<8x128xf32>,
      %c0_89 = arith.constant 0 : index
      %c0_90 = arith.constant 0 : index
      %309 = vector.load %arg10[%c0_89, %c0_90] : memref<8x128xf32, #tpu.memory_space<vmem>>, vector<8x128xf32>
      tpu.vector_store %arg10[%c0_89, %c0_90], %295 {strides = array<i32>} : memref<8x128xf32, #tpu.memory_space<vmem>>, vector<8x128xf32>,
    } else {
    }
    return
  }
  func.func @transform_0(%arg0: i32, %arg1: i32) -> (i32, i32, i32) {
    %c0_i32 = arith.constant 0 : i32
    %c0_i32_0 = arith.constant 0 : i32
    return %arg1, %arg0, %c0_i32 : i32, i32, i32
  }
  func.func @transform_1(%arg0: i32, %arg1: i32) -> (i32, i32) {
    %c0_i32 = arith.constant 0 : i32
    %c0_i32_0 = arith.constant 0 : i32
    %c0_i32_1 = arith.constant 0 : i32
    return %c0_i32, %c0_i32_0 : i32, i32
  }
  func.func @transform_2(%arg0: i32, %arg1: i32) -> (i32, i32) {
    %c0_i32 = arith.constant 0 : i32
    %c0_i32_0 = arith.constant 0 : i32
    %c0_i32_1 = arith.constant 0 : i32
    return %c0_i32, %c0_i32_0 : i32, i32
  }
  func.func @transform_3(%arg0: i32, %arg1: i32) -> (i32, i32) {
    %c0_i32 = arith.constant 0 : i32
    %c0_i32_0 = arith.constant 0 : i32
    %c0_i32_1 = arith.constant 0 : i32
    return %c0_i32, %c0_i32_0 : i32, i32
  }
  func.func @transform_4(%arg0: i32, %arg1: i32) -> (i32, i32) {
    %c0_i32 = arith.constant 0 : i32
    %c0_i32_0 = arith.constant 0 : i32
    return %arg0, %c0_i32 : i32, i32
  }
  func.func @transform_5(%arg0: i32, %arg1: i32) -> (i32, i32) {
    %c0_i32 = arith.constant 0 : i32
    %c0_i32_0 = arith.constant 0 : i32
    return %arg0, %c0_i32 : i32, i32
  }
  func.func @transform_6(%arg0: i32, %arg1: i32) -> (i32, i32, i32) {
    %c0_i32 = arith.constant 0 : i32
    %c0_i32_0 = arith.constant 0 : i32
    return %arg1, %arg0, %c0_i32 : i32, i32, i32
  }
  func.func @transform_7(%arg0: i32, %arg1: i32) -> (i32, i32) {
    %c0_i32 = arith.constant 0 : i32
    %c0_i32_0 = arith.constant 0 : i32
    return %arg0, %c0_i32 : i32, i32
  }
  func.func @transform_8(%arg0: i32, %arg1: i32) -> (i32, i32) {
    %c0_i32 = arith.constant 0 : i32
    %c0_i32_0 = arith.constant 0 : i32
    return %arg0, %c0_i32 : i32, i32
  }
}

</mosaic_0001>

<llo_original>
// kernel: tpu_custom_call.1
$region0: #{tpu_custom_call.1}
  #allocation0 [shape = 'u32[]', space=smem, size = 0x4, offset = 0x4, fixed_abs, tag = 'smem constant byte address 0x4 - core index']
  #allocation1 [shape = 'u32[72,128]{1,0:T(1,128)}', space=vmem, size = 0x9000, scoped, tag = 'internal scratch']
  #allocation2 [shape = 'f32[8,8,512]{2,1,0:T(8,128)}', space=vmem, size = 0x20000, scoped, tag = 'scratch operand']
  #allocation3 [shape = 'f32[8,128]{1,0:T(8,128)}', space=vmem, size = 0x1000, scoped, tag = 'scratch operand']
  #allocation4 [shape = 'f32[8,128]{1,0:T(8,128)}', space=vmem, size = 0x1000, scoped, tag = 'scratch operand']
  %s0 = inlined_call_operand.hbm [shape: bf16[8,8,8], index: 0, kind: input, shape index: {}]
  %s1 = inlined_call_operand.hbm [shape: bf16[8,512], index: 1, kind: input, shape index: {}]
  %s2 = inlined_call_operand.hbm [shape: f32[1,512], index: 2, kind: input, shape index: {}]
  %s3 = inlined_call_operand.hbm [shape: bf16[128,512], index: 3, kind: input, shape index: {}]
  %s4 = inlined_call_operand.hbm [shape: f32[8,128], index: 4, kind: input, shape index: {}]
  %s5 = inlined_call_operand.hbm [shape: f32[8,128], index: 5, kind: input, shape index: {}]
  %s6 = inlined_call_operand.hbm [shape: bf16[8,8,128], index: 6, kind: output, shape index: {0}]
  %s7 = inlined_call_operand.hbm [shape: f32[8,128], index: 7, kind: output, shape index: {1}]
  %s8 = inlined_call_operand.hbm [shape: f32[8,128], index: 8, kind: output, shape index: {2}]
  %9 = xla_tuple %s6, %s7, %s8
  %s10 = sld [smem:[#allocation0]]
  $region82: #{tpu_custom_call.1} parent=0
    _
  %s12 = ssub.s32 1, %s10
  %s13 = scalar_select 0, %s12, %s10
  $region1: #{tpu_custom_call.1} parent=0
    #allocation5 [shape = 'u8[16384]{0}', space=vmem, size = 0x4000, scoped, tag = 'input window, operand 0, single buffered']
    #allocation6 [shape = 's32[1]{0}', space=sflag, size = 0x4, scoped, tag = 'scoped memory for tpu_custom_call.1']
    #allocation7 [shape = 's32[1]{0}', space=sflag, size = 0x4, scoped, tag = 'scoped memory for tpu_custom_call.1']
    #allocation8 [shape = 'u8[8192]{0}', space=vmem, size = 0x2000, scoped, tag = 'input window, operand 1, single buffered']
    #allocation9 [shape = 's32[1]{0}', space=sflag, size = 0x4, scoped, tag = 'scoped memory for tpu_custom_call.1']
    #allocation10 [shape = 'u8[2048]{0}', space=vmem, size = 0x800, scoped, tag = 'input window, operand 2, single buffered']
    #allocation11 [shape = 'u8[131072]{0}', space=vmem, size = 0x20000, scoped, tag = 'input window, operand 3, single buffered']
    #allocation12 [shape = 's32[1]{0}', space=sflag, size = 0x4, scoped, tag = 'scoped memory for tpu_custom_call.1']
    #allocation13 [shape = 'u8[4096]{0}', space=vmem, size = 0x1000, scoped, tag = 'input window, operand 4, single buffered']
    #allocation14 [shape = 'u8[4096]{0}', space=vmem, size = 0x1000, scoped, tag = 'input window, operand 5, single buffered']
    #allocation15 [shape = 's32[1]{0}', space=sflag, size = 0x4, scoped, tag = 'scoped memory for tpu_custom_call.1']
    #allocation16 [shape = 'u8[16384]{0}', space=vmem, size = 0x4000, scoped, tag = 'output window, operand 0, single buffered']
    #allocation17 [shape = 'u8[4096]{0}', space=vmem, size = 0x1000, scoped, tag = 'output window, operand 1, single buffered']
    #allocation18 [shape = 's32[1]{0}', space=sflag, size = 0x4, scoped, tag = 'scoped memory for tpu_custom_call.1']
    #allocation19 [shape = 'u8[4096]{0}', space=vmem, size = 0x1000, scoped, tag = 'output window, operand 2, single buffered']
    %14 = vsyncpa [#allocation6], 0
    %15 = vsyncpa [#allocation9], 0
    %16 = vsyncpa [#allocation12], 0
    %17 = vsyncpa [#allocation15], 0
    %18 = vsyncpa [#allocation7], 0
    %19 = vsyncpa [#allocation18], 0
    // Predicated region
    $region2: #{tpu_custom_call.1} parent=1 // pred_check
      _
    $region3: #{tpu_custom_call.1} parent=1 // pred_check_branch
      %21 = sbr.rel (0) target = $region5
    $region4: #{tpu_custom_call.1} parent=1 // pred_region
      %23 = vsyncadd [#allocation6], 0
      %s24 = sshll.u32 %s0, 4
      %s25 = int_to_ptr.hbm [resolvable:$true] %s24
      %s26 = sshll.u32 [#allocation5], 4
      %s27 = int_to_ptr.vmem [resolvable:$true] %s26
      %32 = dma.hbm_to_vmem [thread:$0]  %s25, 512, %s27, [#allocation6], 64, 64, 4
    $region5: #{tpu_custom_call.1} parent=1 // pred_fallthru
      _
    // Predicated region
    $region6: #{tpu_custom_call.1} parent=1 // pred_check
      _
    $region7: #{tpu_custom_call.1} parent=1 // pred_check_branch
      %34 = sbr.rel (0) target = $region9
    $region8: #{tpu_custom_call.1} parent=1 // pred_region
      %36 = vsyncadd [#allocation9], 0
      %s38 = sshll.u32 %s1, 4
      %s39 = int_to_ptr.hbm [resolvable:$true] %s38
      %s40 = sshll.u32 [#allocation8], 4
      %s41 = int_to_ptr.vmem [resolvable:$true] %s40
      %43 = dma.hbm_to_vmem [thread:$0]  %s39, 256, %s41, [#allocation9]
    $region9: #{tpu_custom_call.1} parent=1 // pred_fallthru
      _
    // Predicated region
    $region10: #{tpu_custom_call.1} parent=1 // pred_check
      _
    $region11: #{tpu_custom_call.1} parent=1 // pred_check_branch
      %45 = sbr.rel (0) target = $region13
    $region12: #{tpu_custom_call.1} parent=1 // pred_region
      %47 = vsyncadd [#allocation9], 0
      %s49 = sshll.u32 %s2, 4
      %s50 = int_to_ptr.hbm [resolvable:$true] %s49
      %s51 = sshll.u32 [#allocation10], 4
      %s52 = int_to_ptr.vmem [resolvable:$true] %s51
      %54 = dma.hbm_to_vmem [thread:$0]  %s50, 64, %s52, [#allocation9]
    $region13: #{tpu_custom_call.1} parent=1 // pred_fallthru
      _
    // Predicated region
    $region14: #{tpu_custom_call.1} parent=1 // pred_check
      _
    $region15: #{tpu_custom_call.1} parent=1 // pred_check_branch
      %56 = sbr.rel (0) target = $region17
    $region16: #{tpu_custom_call.1} parent=1 // pred_region
      %58 = vsyncadd [#allocation12], 0
      %s59 = sshll.u32 %s3, 4
      %s60 = int_to_ptr.hbm [resolvable:$true] %s59
      %s61 = sshll.u32 [#allocation11], 4
      %s62 = int_to_ptr.vmem [resolvable:$true] %s61
      %67 = dma.hbm_to_vmem [thread:$0]  %s60, 4096, %s62, [#allocation12], 256, 256, 16
    $region17: #{tpu_custom_call.1} parent=1 // pred_fallthru
      _
    // Predicated region
    $region18: #{tpu_custom_call.1} parent=1 // pred_check
      _
    $region19: #{tpu_custom_call.1} parent=1 // pred_check_branch
      %69 = sbr.rel (0) target = $region21
    $region20: #{tpu_custom_call.1} parent=1 // pred_region
      %71 = vsyncadd [#allocation12], 0
      %s73 = sshll.u32 %s4, 4
      %s74 = int_to_ptr.hbm [resolvable:$true] %s73
      %s75 = sshll.u32 [#allocation13], 4
      %s76 = int_to_ptr.vmem [resolvable:$true] %s75
      %78 = dma.hbm_to_vmem [thread:$0]  %s74, 128, %s76, [#allocation12]
    $region21: #{tpu_custom_call.1} parent=1 // pred_fallthru
      _
    // Predicated region
    $region22: #{tpu_custom_call.1} parent=1 // pred_check
      _
    $region23: #{tpu_custom_call.1} parent=1 // pred_check_branch
      %80 = sbr.rel (0) target = $region25
    $region24: #{tpu_custom_call.1} parent=1 // pred_region
      %82 = vsyncadd [#allocation15], 0
      %s84 = sshll.u32 %s5, 4
      %s85 = int_to_ptr.hbm [resolvable:$true] %s84
      %s86 = sshll.u32 [#allocation14], 4
      %s87 = int_to_ptr.vmem [resolvable:$true] %s86
      %89 = dma.hbm_to_vmem [thread:$0]  %s85, 128, %s87, [#allocation15]
    $region25: #{tpu_custom_call.1} parent=1 // pred_fallthru
      _
    // Predicated region
    $region26: #{tpu_custom_call.1} parent=1 // pred_check
      _
    $region27: #{tpu_custom_call.1} parent=1 // pred_check_branch
      %91 = sbr.rel (0) target = $region29
    $region28: #{tpu_custom_call.1} parent=1 // pred_region
      %93 = dma.done [#allocation6], 512
    $region29: #{tpu_custom_call.1} parent=1 // pred_fallthru
      _
    // Predicated region
    $region30: #{tpu_custom_call.1} parent=1 // pred_check
      _
    $region31: #{tpu_custom_call.1} parent=1 // pred_check_branch
      %95 = sbr.rel (0) target = $region33
    $region32: #{tpu_custom_call.1} parent=1 // pred_region
      %97 = dma.done [#allocation9], 256
    $region33: #{tpu_custom_call.1} parent=1 // pred_fallthru
      _
    // Predicated region
    $region34: #{tpu_custom_call.1} parent=1 // pred_check
      _
    $region35: #{tpu_custom_call.1} parent=1 // pred_check_branch
      %99 = sbr.rel (0) target = $region37
    $region36: #{tpu_custom_call.1} parent=1 // pred_region
      %101 = dma.done [#allocation9], 64
    $region37: #{tpu_custom_call.1} parent=1 // pred_fallthru
      _
    // Predicated region
    $region38: #{tpu_custom_call.1} parent=1 // pred_check
      _
    $region39: #{tpu_custom_call.1} parent=1 // pred_check_branch
      %103 = sbr.rel (0) target = $region41
    $region40: #{tpu_custom_call.1} parent=1 // pred_region
      %105 = dma.done [#allocation12], 4096
    $region41: #{tpu_custom_call.1} parent=1 // pred_fallthru
      _
    // Predicated region
    $region42: #{tpu_custom_call.1} parent=1 // pred_check
      _
    $region43: #{tpu_custom_call.1} parent=1 // pred_check_branch
      %107 = sbr.rel (0) target = $region45
    $region44: #{tpu_custom_call.1} parent=1 // pred_region
      %109 = dma.done [#allocation12], 128
    $region45: #{tpu_custom_call.1} parent=1 // pred_fallthru
      _
    // Predicated region
    $region46: #{tpu_custom_call.1} parent=1 // pred_check
      _
    $region47: #{tpu_custom_call.1} parent=1 // pred_check_branch
      %111 = sbr.rel (0) target = $region49
    $region48: #{tpu_custom_call.1} parent=1 // pred_region
      %113 = dma.done [#allocation15], 128
    $region49: #{tpu_custom_call.1} parent=1 // pred_fallthru
      _
    %p115 = scmp.eq.s32.totalorder 0, 0
    // Predicated region
    $region50: #{tpu_custom_call.1} parent=1 // pred_check
      %p116 = pneg %p115
    $region51: #{tpu_custom_call.1} parent=1 // pred_check_branch
      %118 = sbr.rel (%p116) target = $region53
    $region52: #{tpu_custom_call.1} parent=1 // pred_region
      %v119 = vld [vmem:[#allocation13] sm:$0xff]
      %120 = vst [vmem:[#allocation3] sm:$0xff] %v119
      %v121 = vld [vmem:[#allocation14] sm:$0xff]
      %122 = vst [vmem:[#allocation4] sm:$0xff] %v121
    $region53: #{tpu_custom_call.1} parent=1 // pred_fallthru
      _
    %v123 = vld [vmem:[#allocation5] sm:$0xf]
    %v124 = vld [vmem:[#allocation5 + $0x4] sm:$0xf]
    %v125 = vld [vmem:[#allocation5 + $0x8] sm:$0xf]
    %v126 = vld [vmem:[#allocation5 + $0xc] sm:$0xf]
    %v127 = vld [vmem:[#allocation5 + $0x10] sm:$0xf]
    %v128 = vld [vmem:[#allocation5 + $0x14] sm:$0xf]
    %v129 = vld [vmem:[#allocation5 + $0x18] sm:$0xf]
    %v130 = vld [vmem:[#allocation5 + $0x1c] sm:$0xf]
    %v131 = vld [vmem:[#allocation8] sm:$0xff]
    %v132 = vld [vmem:[#allocation8 + $0x8] sm:$0xff]
    %v133 = vld [vmem:[#allocation10] sm:$0xf]
    %v135 = vperm.slane %v133, 0
    %v136 = vperm.slane %v133, 1
    %v137 = vperm.slane %v133, 2
    %v138 = vperm.slane %v133, 3
    %v151 = vunpack.c.l.b16 %v123
    %v152 = vunpack.c.l.b16 %v124
    %v153 = vunpack.c.l.b16 %v125
    %v154 = vunpack.c.l.b16 %v126
    %v155 = vunpack.c.l.b16 %v127
    %v156 = vunpack.c.l.b16 %v128
    %v157 = vunpack.c.l.b16 %v129
    %v158 = vunpack.c.l.b16 %v130
    %v159 = vpack.c.b16 %v152, %v151
    %v160 = vpack.c.b16 %v154, %v153
    %v161 = vpack.c.b16 %v156, %v155
    %v162 = vpack.c.b16 %v158, %v157
    %v165 = vunpack.c.l.b16 %v131
    %v166 = vunpack.c.h.b16 %v131
    %v167 = vunpack.c.l.b16 %v132
    %v168 = vunpack.c.h.b16 %v132
    %v169 = vpack.c.b16 %v165, %v165
    %v170 = vpack.c.b16 %v166, %v166
    %v171 = vpack.c.b16 %v167, %v167
    %v172 = vpack.c.b16 %v168, %v168
    %vm173 = vcmask 64512
    %v175 = vsel %vm173, %v159, 0
    %v178 = vsel %vm173, %v160, 0
    %v181 = vsel %vm173, %v161, 0
    %v184 = vsel %vm173, %v162, 0
    %vm186 = vcmask 1043456
    %v188 = vsel %vm186, %v169, 0
    %v191 = vsel %vm186, %v170, 0
    %v194 = vsel %vm186, %v171, 0
    %v197 = vsel %vm186, %v172, 0
    %199 = vmatpush.bf16.msra.mxu0 0
    %200 = vmatpush.bf16.msra.mxu0 0
    %201 = vmatpush.bf16.msra.mxu0 0
    %202 = vmatpush.bf16.msra.mxu0 0
    %203 = vmatpush.bf16.msra.mxu0 0
    %204 = vmatpush.bf16.msra.mxu0 0
    %205 = vmatpush.bf16.msra.mxu0 0
    %206 = vmatpush.bf16.msra.mxu0 %v188
    %207 = vmatmul.bf16.gmra.mxu0 %v175
    %v208 = vpop.f32.mrf.mxu0
    %v209 = vadd.f32 %v135, %v208
    %v210 = vpop.f32.mrf.mxu0
    %v211 = vadd.f32 %v135, %v210
    %212 = vmatmul.bf16.gmra.mxu0 %v178
    %v213 = vpop.f32.mrf.mxu0
    %v214 = vadd.f32 %v135, %v213
    %v215 = vpop.f32.mrf.mxu0
    %v216 = vadd.f32 %v135, %v215
    %217 = vmatmul.bf16.gmra.mxu0 %v181
    %v218 = vpop.f32.mrf.mxu0
    %v219 = vadd.f32 %v135, %v218
    %v220 = vpop.f32.mrf.mxu0
    %v221 = vadd.f32 %v135, %v220
    %222 = vmatmul.bf16.gmra.mxu0 %v184
    %v223 = vpop.f32.mrf.mxu0
    %v224 = vadd.f32 %v135, %v223
    %v225 = vpop.f32.mrf.mxu0
    %v226 = vadd.f32 %v135, %v225
    %227 = vdwg.mxu0
    %228 = vmatpush.bf16.msra.mxu0 0
    %229 = vmatpush.bf16.msra.mxu0 0
    %230 = vmatpush.bf16.msra.mxu0 0
    %231 = vmatpush.bf16.msra.mxu0 0
    %232 = vmatpush.bf16.msra.mxu0 0
    %233 = vmatpush.bf16.msra.mxu0 0
    %234 = vmatpush.bf16.msra.mxu0 0
    %235 = vmatpush.bf16.msra.mxu0 %v191
    %236 = vmatmul.bf16.gmra.mxu0 %v175
    %v237 = vpop.f32.mrf.mxu0
    %v238 = vadd.f32 %v136, %v237
    %v239 = vpop.f32.mrf.mxu0
    %v240 = vadd.f32 %v136, %v239
    %241 = vmatmul.bf16.gmra.mxu0 %v178
    %v242 = vpop.f32.mrf.mxu0
    %v243 = vadd.f32 %v136, %v242
    %v244 = vpop.f32.mrf.mxu0
    %v245 = vadd.f32 %v136, %v244
    %246 = vmatmul.bf16.gmra.mxu0 %v181
    %v247 = vpop.f32.mrf.mxu0
    %v248 = vadd.f32 %v136, %v247
    %v249 = vpop.f32.mrf.mxu0
    %v250 = vadd.f32 %v136, %v249
    %251 = vmatmul.bf16.gmra.mxu0 %v184
    %v252 = vpop.f32.mrf.mxu0
    %v253 = vadd.f32 %v136, %v252
    %v254 = vpop.f32.mrf.mxu0
    %v255 = vadd.f32 %v136, %v254
    %256 = vdwg.mxu0
    %257 = vmatpush.bf16.msra.mxu0 0
    %258 = vmatpush.bf16.msra.mxu0 0
    %259 = vmatpush.bf16.msra.mxu0 0
    %260 = vmatpush.bf16.msra.mxu0 0
    %261 = vmatpush.bf16.msra.mxu0 0
    %262 = vmatpush.bf16.msra.mxu0 0
    %263 = vmatpush.bf16.msra.mxu0 0
    %264 = vmatpush.bf16.msra.mxu0 %v194
    %265 = vmatmul.bf16.gmra.mxu0 %v175
    %v266 = vpop.f32.mrf.mxu0
    %v267 = vadd.f32 %v137, %v266
    %v268 = vpop.f32.mrf.mxu0
    %v269 = vadd.f32 %v137, %v268
    %270 = vmatmul.bf16.gmra.mxu0 %v178
    %v271 = vpop.f32.mrf.mxu0
    %v272 = vadd.f32 %v137, %v271
    %v273 = vpop.f32.mrf.mxu0
    %v274 = vadd.f32 %v137, %v273
    %275 = vmatmul.bf16.gmra.mxu0 %v181
    %v276 = vpop.f32.mrf.mxu0
    %v277 = vadd.f32 %v137, %v276
    %v278 = vpop.f32.mrf.mxu0
    %v279 = vadd.f32 %v137, %v278
    %280 = vmatmul.bf16.gmra.mxu0 %v184
    %v281 = vpop.f32.mrf.mxu0
    %v282 = vadd.f32 %v137, %v281
    %v283 = vpop.f32.mrf.mxu0
    %v284 = vadd.f32 %v137, %v283
    %285 = vdwg.mxu0
    %286 = vmatpush.bf16.msra.mxu0 0
    %287 = vmatpush.bf16.msra.mxu0 0
    %288 = vmatpush.bf16.msra.mxu0 0
    %289 = vmatpush.bf16.msra.mxu0 0
    %290 = vmatpush.bf16.msra.mxu0 0
    %291 = vmatpush.bf16.msra.mxu0 0
    %292 = vmatpush.bf16.msra.mxu0 0
    %293 = vmatpush.bf16.msra.mxu0 %v197
    %294 = vmatmul.bf16.gmra.mxu0 %v175
    %v295 = vpop.f32.mrf.mxu0
    %v296 = vadd.f32 %v138, %v295
    %v297 = vpop.f32.mrf.mxu0
    %v298 = vadd.f32 %v138, %v297
    %299 = vmatmul.bf16.gmra.mxu0 %v178
    %v300 = vpop.f32.mrf.mxu0
    %v301 = vadd.f32 %v138, %v300
    %v302 = vpop.f32.mrf.mxu0
    %v303 = vadd.f32 %v138, %v302
    %304 = vmatmul.bf16.gmra.mxu0 %v181
    %v305 = vpop.f32.mrf.mxu0
    %v306 = vadd.f32 %v138, %v305
    %v307 = vpop.f32.mrf.mxu0
    %v308 = vadd.f32 %v138, %v307
    %309 = vmatmul.bf16.gmra.mxu0 %v184
    %v310 = vpop.f32.mrf.mxu0
    %v311 = vadd.f32 %v138, %v310
    %v312 = vpop.f32.mrf.mxu0
    %v313 = vadd.f32 %v138, %v312
    %314 = vdwg.mxu0
    %315 = vst [vmem:[#allocation2] sm:$0xff] %v209
    %316 = vst [vmem:[#allocation2 + $0x8] sm:$0xff] %v238
    %317 = vst [vmem:[#allocation2 + $0x10] sm:$0xff] %v267
    %318 = vst [vmem:[#allocation2 + $0x18] sm:$0xff] %v296
    %319 = vst [vmem:[#allocation2 + $0x20] sm:$0xff] %v211
    %320 = vst [vmem:[#allocation2 + $0x28] sm:$0xff] %v240
    %321 = vst [vmem:[#allocation2 + $0x30] sm:$0xff] %v269
    %322 = vst [vmem:[#allocation2 + $0x38] sm:$0xff] %v298
    %323 = vst [vmem:[#allocation2 + $0x40] sm:$0xff] %v214
    %324 = vst [vmem:[#allocation2 + $0x48] sm:$0xff] %v243
    %325 = vst [vmem:[#allocation2 + $0x50] sm:$0xff] %v272
    %326 = vst [vmem:[#allocation2 + $0x58] sm:$0xff] %v301
    %327 = vst [vmem:[#allocation2 + $0x60] sm:$0xff] %v216
    %328 = vst [vmem:[#allocation2 + $0x68] sm:$0xff] %v245
    %329 = vst [vmem:[#allocation2 + $0x70] sm:$0xff] %v274
    %330 = vst [vmem:[#allocation2 + $0x78] sm:$0xff] %v303
    %331 = vst [vmem:[#allocation2 + $0x80] sm:$0xff] %v219
    %332 = vst [vmem:[#allocation2 + $0x88] sm:$0xff] %v248
    %333 = vst [vmem:[#allocation2 + $0x90] sm:$0xff] %v277
    %334 = vst [vmem:[#allocation2 + $0x98] sm:$0xff] %v306
    %335 = vst [vmem:[#allocation2 + $0xa0] sm:$0xff] %v221
    %336 = vst [vmem:[#allocation2 + $0xa8] sm:$0xff] %v250
    %337 = vst [vmem:[#allocation2 + $0xb0] sm:$0xff] %v279
    %338 = vst [vmem:[#allocation2 + $0xb8] sm:$0xff] %v308
    %339 = vst [vmem:[#allocation2 + $0xc0] sm:$0xff] %v224
    %340 = vst [vmem:[#allocation2 + $0xc8] sm:$0xff] %v253
    %341 = vst [vmem:[#allocation2 + $0xd0] sm:$0xff] %v282
    %342 = vst [vmem:[#allocation2 + $0xd8] sm:$0xff] %v311
    %343 = vst [vmem:[#allocation2 + $0xe0] sm:$0xff] %v226
    %344 = vst [vmem:[#allocation2 + $0xe8] sm:$0xff] %v255
    %345 = vst [vmem:[#allocation2 + $0xf0] sm:$0xff] %v284
    %346 = vst [vmem:[#allocation2 + $0xf8] sm:$0xff] %v313
    %v347 = vld [vmem:[#allocation11] sm:$0xff]
    %v348 = vld [vmem:[#allocation11 + $0x8] sm:$0xff]
    %v349 = vld [vmem:[#allocation11 + $0x10] sm:$0xff]
    %v350 = vld [vmem:[#allocation11 + $0x18] sm:$0xff]
    %v351 = vld [vmem:[#allocation11 + $0x20] sm:$0xff]
    %v352 = vld [vmem:[#allocation11 + $0x28] sm:$0xff]
    %v353 = vld [vmem:[#allocation11 + $0x30] sm:$0xff]
    %v354 = vld [vmem:[#allocation11 + $0x38] sm:$0xff]
    %v355 = vld [vmem:[#allocation11 + $0x40] sm:$0xff]
    %v356 = vld [vmem:[#allocation11 + $0x48] sm:$0xff]
    %v357 = vld [vmem:[#allocation11 + $0x50] sm:$0xff]
    %v358 = vld [vmem:[#allocation11 + $0x58] sm:$0xff]
    %v359 = vld [vmem:[#allocation11 + $0x60] sm:$0xff]
    %v360 = vld [vmem:[#allocation11 + $0x68] sm:$0xff]
    %v361 = vld [vmem:[#allocation11 + $0x70] sm:$0xff]
    %v362 = vld [vmem:[#allocation11 + $0x78] sm:$0xff]
    %v363 = vld [vmem:[#allocation11 + $0x80] sm:$0xff]
    %v364 = vld [vmem:[#allocation11 + $0x88] sm:$0xff]
    %v365 = vld [vmem:[#allocation11 + $0x90] sm:$0xff]
    %v366 = vld [vmem:[#allocation11 + $0x98] sm:$0xff]
    %v367 = vld [vmem:[#allocation11 + $0xa0] sm:$0xff]
    %v368 = vld [vmem:[#allocation11 + $0xa8] sm:$0xff]
    %v369 = vld [vmem:[#allocation11 + $0xb0] sm:$0xff]
    %v370 = vld [vmem:[#allocation11 + $0xb8] sm:$0xff]
    %v371 = vld [vmem:[#allocation11 + $0xc0] sm:$0xff]
    %v372 = vld [vmem:[#allocation11 + $0xc8] sm:$0xff]
    %v373 = vld [vmem:[#allocation11 + $0xd0] sm:$0xff]
    %v374 = vld [vmem:[#allocation11 + $0xd8] sm:$0xff]
    %v375 = vld [vmem:[#allocation11 + $0xe0] sm:$0xff]
    %v376 = vld [vmem:[#allocation11 + $0xe8] sm:$0xff]
    %v377 = vld [vmem:[#allocation11 + $0xf0] sm:$0xff]
    %v378 = vld [vmem:[#allocation11 + $0xf8] sm:$0xff]
    %v379 = vld [vmem:[#allocation3] sm:$0xff]
    %v380 = vld [vmem:[#allocation4] sm:$0xff]
    %v381 = vld [vmem:[#allocation2] sm:$0xff]
    %v382 = vld [vmem:[#allocation2 + $0x8] sm:$0xff]
    %v383 = vld [vmem:[#allocation2 + $0x10] sm:$0xff]
    %v384 = vld [vmem:[#allocation2 + $0x18] sm:$0xff]
    %v385 = vpack.c.bf16 %v379, %v379
    %v418 = vunpack.c.l.b16 %v347
    %v419 = vunpack.c.h.b16 %v347
    %v420 = vunpack.c.l.b16 %v348
    %v421 = vunpack.c.h.b16 %v348
    %v422 = vunpack.c.l.b16 %v349
    %v423 = vunpack.c.h.b16 %v349
    %v424 = vunpack.c.l.b16 %v350
    %v425 = vunpack.c.h.b16 %v350
    %v426 = vunpack.c.l.b16 %v351
    %v427 = vunpack.c.h.b16 %v351
    %v428 = vunpack.c.l.b16 %v352
    %v429 = vunpack.c.h.b16 %v352
    %v430 = vunpack.c.l.b16 %v353
    %v431 = vunpack.c.h.b16 %v353
    %v432 = vunpack.c.l.b16 %v354
    %v433 = vunpack.c.h.b16 %v354
    %v434 = vunpack.c.l.b16 %v355
    %v435 = vunpack.c.h.b16 %v355
    %v436 = vunpack.c.l.b16 %v356
    %v437 = vunpack.c.h.b16 %v356
    %v438 = vunpack.c.l.b16 %v357
    %v439 = vunpack.c.h.b16 %v357
    %v440 = vunpack.c.l.b16 %v358
    %v441 = vunpack.c.h.b16 %v358
    %v442 = vunpack.c.l.b16 %v359
    %v443 = vunpack.c.h.b16 %v359
    %v444 = vunpack.c.l.b16 %v360
    %v445 = vunpack.c.h.b16 %v360
    %v446 = vunpack.c.l.b16 %v361
    %v447 = vunpack.c.h.b16 %v361
    %v448 = vunpack.c.l.b16 %v362
    %v449 = vunpack.c.h.b16 %v362
    %v450 = vunpack.c.l.b16 %v363
    %v451 = vunpack.c.h.b16 %v363
    %v452 = vunpack.c.l.b16 %v364
    %v453 = vunpack.c.h.b16 %v364
    %v454 = vunpack.c.l.b16 %v365
    %v455 = vunpack.c.h.b16 %v365
    %v456 = vunpack.c.l.b16 %v366
    %v457 = vunpack.c.h.b16 %v366
    %v458 = vunpack.c.l.b16 %v367
    %v459 = vunpack.c.h.b16 %v367
    %v460 = vunpack.c.l.b16 %v368
    %v461 = vunpack.c.h.b16 %v368
    %v462 = vunpack.c.l.b16 %v369
    %v463 = vunpack.c.h.b16 %v369
    %v464 = vunpack.c.l.b16 %v370
    %v465 = vunpack.c.h.b16 %v370
    %v466 = vunpack.c.l.b16 %v371
    %v467 = vunpack.c.h.b16 %v371
    %v468 = vunpack.c.l.b16 %v372
    %v469 = vunpack.c.h.b16 %v372
    %v470 = vunpack.c.l.b16 %v373
    %v471 = vunpack.c.h.b16 %v373
    %v472 = vunpack.c.l.b16 %v374
    %v473 = vunpack.c.h.b16 %v374
    %v474 = vunpack.c.l.b16 %v375
    %v475 = vunpack.c.h.b16 %v375
    %v476 = vunpack.c.l.b16 %v376
    %v477 = vunpack.c.h.b16 %v376
    %v478 = vunpack.c.l.b16 %v377
    %v479 = vunpack.c.h.b16 %v377
    %v480 = vunpack.c.l.b16 %v378
    %v481 = vunpack.c.h.b16 %v378
    %v482 = vpack.c.b16 %v422, %v418
    %v483 = vpack.c.b16 %v423, %v419
    %v484 = vpack.c.b16 %v424, %v420
    %v485 = vpack.c.b16 %v425, %v421
    %v486 = vpack.c.b16 %v430, %v426
    %v487 = vpack.c.b16 %v431, %v427
    %v488 = vpack.c.b16 %v432, %v428
    %v489 = vpack.c.b16 %v433, %v429
    %v490 = vpack.c.b16 %v438, %v434
    %v491 = vpack.c.b16 %v439, %v435
    %v492 = vpack.c.b16 %v440, %v436
    %v493 = vpack.c.b16 %v441, %v437
    %v494 = vpack.c.b16 %v446, %v442
    %v495 = vpack.c.b16 %v447, %v443
    %v496 = vpack.c.b16 %v448, %v444
    %v497 = vpack.c.b16 %v449, %v445
    %v498 = vpack.c.b16 %v454, %v450
    %v499 = vpack.c.b16 %v455, %v451
    %v500 = vpack.c.b16 %v456, %v452
    %v501 = vpack.c.b16 %v457, %v453
    %v502 = vpack.c.b16 %v462, %v458
    %v503 = vpack.c.b16 %v463, %v459
    %v504 = vpack.c.b16 %v464, %v460
    %v505 = vpack.c.b16 %v465, %v461
    %v506 = vpack.c.b16 %v470, %v466
    %v507 = vpack.c.b16 %v471, %v467
    %v508 = vpack.c.b16 %v472, %v468
    %v509 = vpack.c.b16 %v473, %v469
    %v510 = vpack.c.b16 %v478, %v474
    %v511 = vpack.c.b16 %v479, %v475
    %v512 = vpack.c.b16 %v480, %v476
    %v513 = vpack.c.b16 %v481, %v477
    %546 = vmatpush.bf16.msra.mxu0 %v510
    %547 = vmatpush.bf16.msra.mxu0 %v506
    %548 = vmatpush.bf16.msra.mxu0 %v502
    %549 = vmatpush.bf16.msra.mxu0 %v498
    %550 = vmatpush.bf16.msra.mxu0 %v494
    %551 = vmatpush.bf16.msra.mxu0 %v490
    %552 = vmatpush.bf16.msra.mxu0 %v486
    %553 = vmatpush.bf16.msra.mxu0 %v482
    %554 = vmatmul.bf16.gmra.mxu0 %v385
    %v555 = vpop.f32.mrf.mxu0
    %v556 = vadd.f32 0.0, %v555
    %v557 = vpop.f32.mrf.mxu0
    %558 = vdwg.mxu0
    %559 = vmatpush.bf16.msra.mxu0 %v511
    %560 = vmatpush.bf16.msra.mxu0 %v507
    %561 = vmatpush.bf16.msra.mxu0 %v503
    %562 = vmatpush.bf16.msra.mxu0 %v499
    %563 = vmatpush.bf16.msra.mxu0 %v495
    %564 = vmatpush.bf16.msra.mxu0 %v491
    %565 = vmatpush.bf16.msra.mxu0 %v487
    %566 = vmatpush.bf16.msra.mxu0 %v483
    %567 = vmatmul.bf16.gmra.mxu0 %v385
    %v568 = vpop.f32.mrf.mxu0
    %v569 = vadd.f32 0.0, %v568
    %v570 = vpop.f32.mrf.mxu0
    %571 = vdwg.mxu0
    %572 = vmatpush.bf16.msra.mxu0 %v512
    %573 = vmatpush.bf16.msra.mxu0 %v508
    %574 = vmatpush.bf16.msra.mxu0 %v504
    %575 = vmatpush.bf16.msra.mxu0 %v500
    %576 = vmatpush.bf16.msra.mxu0 %v496
    %577 = vmatpush.bf16.msra.mxu0 %v492
    %578 = vmatpush.bf16.msra.mxu0 %v488
    %579 = vmatpush.bf16.msra.mxu0 %v484
    %580 = vmatmul.bf16.gmra.mxu0 %v385
    %v581 = vpop.f32.mrf.mxu0
    %v582 = vadd.f32 0.0, %v581
    %v583 = vpop.f32.mrf.mxu0
    %584 = vdwg.mxu0
    %585 = vmatpush.bf16.msra.mxu0 %v513
    %586 = vmatpush.bf16.msra.mxu0 %v509
    %587 = vmatpush.bf16.msra.mxu0 %v505
    %588 = vmatpush.bf16.msra.mxu0 %v501
    %589 = vmatpush.bf16.msra.mxu0 %v497
    %590 = vmatpush.bf16.msra.mxu0 %v493
    %591 = vmatpush.bf16.msra.mxu0 %v489
    %592 = vmatpush.bf16.msra.mxu0 %v485
    %593 = vmatmul.bf16.gmra.mxu0 %v385
    %v594 = vpop.f32.mrf.mxu0
    %v595 = vadd.f32 0.0, %v594
    %v596 = vpop.f32.mrf.mxu0
    %597 = vdwg.mxu0
    %v598 = vadd.f32 %v381, %v556
    %v599 = vadd.f32 %v382, %v569
    %v600 = vadd.f32 %v383, %v582
    %v601 = vadd.f32 %v384, %v595
    %v602 = vxor.u32 %v598, 2147483648
    %v603 = vmul.f32 %v602, 1.442695
    %v604 = vpow.pop %v603
    %v605 = vadd.f32 %v604, 1.0
    %v606 = vrcp.pop %v605
    %v607 = vmul.f32 %v605, %v606
    %v608 = vsub.f32 1.0, %v607
    %v609 = vmul.f32 %v606, %v608
    %v610 = vadd.f32 %v606, %v609
    %vm611 = vweird.f32 %v605
    %vm612 = vweird.f32 %v606
    %vm613 = vmor %vm611, %vm612
    %v614 = vsel %vm613, %v606, %v610
    %v615 = vand.u32 2147483647, %v605
    %vm616 = vcmp.eq.f32.partialorder %v615, 8.507059e+37
    %v617 = vand.u32 %v605, 2147483648
    %v618 = vor.u32 1.1754944e-38, %v617
    %v619 = vsel %vm616, %v618, %v614
    %v620 = vmul.f32 1.0, %v619
    %v621 = vxor.u32 %v599, 2147483648
    %v622 = vmul.f32 %v621, 1.442695
    %v623 = vpow.pop %v622
    %v624 = vadd.f32 %v623, 1.0
    %v625 = vrcp.pop %v624
    %v626 = vmul.f32 %v624, %v625
    %v627 = vsub.f32 1.0, %v626
    %v628 = vmul.f32 %v625, %v627
    %v629 = vadd.f32 %v625, %v628
    %vm630 = vweird.f32 %v624
    %vm631 = vweird.f32 %v625
    %vm632 = vmor %vm630, %vm631
    %v633 = vsel %vm632, %v625, %v629
    %v634 = vand.u32 2147483647, %v624
    %vm635 = vcmp.eq.f32.partialorder %v634, 8.507059e+37
    %v636 = vand.u32 %v624, 2147483648
    %v637 = vor.u32 1.1754944e-38, %v636
    %v638 = vsel %vm635, %v637, %v633
    %v639 = vmul.f32 1.0, %v638
    %v640 = vtanh.pop %v600
    %v641 = vxor.u32 %v601, 2147483648
    %v642 = vmul.f32 %v641, 1.442695
    %v643 = vpow.pop %v642
    %v644 = vadd.f32 %v643, 1.0
    %v645 = vrcp.pop %v644
    %v646 = vmul.f32 %v644, %v645
    %v647 = vsub.f32 1.0, %v646
    %v648 = vmul.f32 %v645, %v647
    %v649 = vadd.f32 %v645, %v648
    %vm650 = vweird.f32 %v644
    %vm651 = vweird.f32 %v645
    %vm652 = vmor %vm650, %vm651
    %v653 = vsel %vm652, %v645, %v649
    %v654 = vand.u32 2147483647, %v644
    %vm655 = vcmp.eq.f32.partialorder %v654, 8.507059e+37
    %v656 = vand.u32 %v644, 2147483648
    %v657 = vor.u32 1.1754944e-38, %v656
    %v658 = vsel %vm655, %v657, %v653
    %v659 = vmul.f32 1.0, %v658
    %v660 = vmul.f32 %v639, %v380
    %v661 = vmul.f32 %v620, %v640
    %v662 = vadd.f32 %v660, %v661
    %v663 = vtanh.pop %v662
    %v664 = vmul.f32 %v659, %v663
    %v665 = vpack.c.bf16 %v664, %v664
    %666 = vst [vmem:[#allocation16] sm:$0xf] %v665
    %s667 = scalar_lea.vmem [#allocation2], 32
    %v668 = vld [vmem:[%s667] sm:$0xff]
    %v669 = vld [vmem:[%s667 + $0x8] sm:$0xff]
    %v670 = vld [vmem:[%s667 + $0x10] sm:$0xff]
    %v671 = vld [vmem:[%s667 + $0x18] sm:$0xff]
    %672 = vmatpush.bf16.msra.mxu0 %v510
    %673 = vmatpush.bf16.msra.mxu0 %v506
    %674 = vmatpush.bf16.msra.mxu0 %v502
    %675 = vmatpush.bf16.msra.mxu0 %v498
    %676 = vmatpush.bf16.msra.mxu0 %v494
    %677 = vmatpush.bf16.msra.mxu0 %v490
    %678 = vmatpush.bf16.msra.mxu0 %v486
    %679 = vmatpush.bf16.msra.mxu0 %v482
    %680 = vmatmul.bf16.gmra.mxu0 %v665
    %v681 = vpop.f32.mrf.mxu0
    %v682 = vadd.f32 0.0, %v681
    %v683 = vpop.f32.mrf.mxu0
    %684 = vdwg.mxu0
    %685 = vmatpush.bf16.msra.mxu0 %v511
    %686 = vmatpush.bf16.msra.mxu0 %v507
    %687 = vmatpush.bf16.msra.mxu0 %v503
    %688 = vmatpush.bf16.msra.mxu0 %v499
    %689 = vmatpush.bf16.msra.mxu0 %v495
    %690 = vmatpush.bf16.msra.mxu0 %v491
    %691 = vmatpush.bf16.msra.mxu0 %v487
    %692 = vmatpush.bf16.msra.mxu0 %v483
    %693 = vmatmul.bf16.gmra.mxu0 %v665
    %v694 = vpop.f32.mrf.mxu0
    %v695 = vadd.f32 0.0, %v694
    %v696 = vpop.f32.mrf.mxu0
    %697 = vdwg.mxu0
    %698 = vmatpush.bf16.msra.mxu0 %v512
    %699 = vmatpush.bf16.msra.mxu0 %v508
    %700 = vmatpush.bf16.msra.mxu0 %v504
    %701 = vmatpush.bf16.msra.mxu0 %v500
    %702 = vmatpush.bf16.msra.mxu0 %v496
    %703 = vmatpush.bf16.msra.mxu0 %v492
    %704 = vmatpush.bf16.msra.mxu0 %v488
    %705 = vmatpush.bf16.msra.mxu0 %v484
    %706 = vmatmul.bf16.gmra.mxu0 %v665
    %v707 = vpop.f32.mrf.mxu0
    %v708 = vadd.f32 0.0, %v707
    %v709 = vpop.f32.mrf.mxu0
    %710 = vdwg.mxu0
    %711 = vmatpush.bf16.msra.mxu0 %v513
    %712 = vmatpush.bf16.msra.mxu0 %v509
    %713 = vmatpush.bf16.msra.mxu0 %v505
    %714 = vmatpush.bf16.msra.mxu0 %v501
    %715 = vmatpush.bf16.msra.mxu0 %v497
    %716 = vmatpush.bf16.msra.mxu0 %v493
    %717 = vmatpush.bf16.msra.mxu0 %v489
    %718 = vmatpush.bf16.msra.mxu0 %v485
    %719 = vmatmul.bf16.gmra.mxu0 %v665
    %v720 = vpop.f32.mrf.mxu0
    %v721 = vadd.f32 0.0, %v720
    %v722 = vpop.f32.mrf.mxu0
    %723 = vdwg.mxu0
    %v724 = vadd.f32 %v668, %v682
    %v725 = vadd.f32 %v669, %v695
    %v726 = vadd.f32 %v670, %v708
    %v727 = vadd.f32 %v671, %v721
    %v728 = vxor.u32 %v724, 2147483648
    %v729 = vmul.f32 %v728, 1.442695
    %v730 = vpow.pop %v729
    %v731 = vadd.f32 %v730, 1.0
    %v732 = vrcp.pop %v731
    %v733 = vmul.f32 %v731, %v732
    %v734 = vsub.f32 1.0, %v733
    %v735 = vmul.f32 %v732, %v734
    %v736 = vadd.f32 %v732, %v735
    %vm737 = vweird.f32 %v731
    %vm738 = vweird.f32 %v732
    %vm739 = vmor %vm737, %vm738
    %v740 = vsel %vm739, %v732, %v736
    %v741 = vand.u32 2147483647, %v731
    %vm742 = vcmp.eq.f32.partialorder %v741, 8.507059e+37
    %v743 = vand.u32 %v731, 2147483648
    %v744 = vor.u32 1.1754944e-38, %v743
    %v745 = vsel %vm742, %v744, %v740
    %v746 = vmul.f32 1.0, %v745
    %v747 = vxor.u32 %v725, 2147483648
    %v748 = vmul.f32 %v747, 1.442695
    %v749 = vpow.pop %v748
    %v750 = vadd.f32 %v749, 1.0
    %v751 = vrcp.pop %v750
    %v752 = vmul.f32 %v750, %v751
    %v753 = vsub.f32 1.0, %v752
    %v754 = vmul.f32 %v751, %v753
    %v755 = vadd.f32 %v751, %v754
    %vm756 = vweird.f32 %v750
    %vm757 = vweird.f32 %v751
    %vm758 = vmor %vm756, %vm757
    %v759 = vsel %vm758, %v751, %v755
    %v760 = vand.u32 2147483647, %v750
    %vm761 = vcmp.eq.f32.partialorder %v760, 8.507059e+37
    %v762 = vand.u32 %v750, 2147483648
    %v763 = vor.u32 1.1754944e-38, %v762
    %v764 = vsel %vm761, %v763, %v759
    %v765 = vmul.f32 1.0, %v764
    %v766 = vtanh.pop %v726
    %v767 = vxor.u32 %v727, 2147483648
    %v768 = vmul.f32 %v767, 1.442695
    %v769 = vpow.pop %v768
    %v770 = vadd.f32 %v769, 1.0
    %v771 = vrcp.pop %v770
    %v772 = vmul.f32 %v770, %v771
    %v773 = vsub.f32 1.0, %v772
    %v774 = vmul.f32 %v771, %v773
    %v775 = vadd.f32 %v771, %v774
    %vm776 = vweird.f32 %v770
    %vm777 = vweird.f32 %v771
    %vm778 = vmor %vm776, %vm777
    %v779 = vsel %vm778, %v771, %v775
    %v780 = vand.u32 2147483647, %v770
    %vm781 = vcmp.eq.f32.partialorder %v780, 8.507059e+37
    %v782 = vand.u32 %v770, 2147483648
    %v783 = vor.u32 1.1754944e-38, %v782
    %v784 = vsel %vm781, %v783, %v779
    %v785 = vmul.f32 1.0, %v784
    %v786 = vmul.f32 %v765, %v662
    %v787 = vmul.f32 %v746, %v766
    %v788 = vadd.f32 %v786, %v787
    %v789 = vtanh.pop %v788
    %v790 = vmul.f32 %v785, %v789
    %v791 = vpack.c.bf16 %v790, %v790
    %s792 = scalar_lea.vmem [#allocation16], 4
    %793 = vst [vmem:[%s792] sm:$0xf] %v791
    %s794 = scalar_lea.vmem [#allocation2], 64
    %v795 = vld [vmem:[%s794] sm:$0xff]
    %v796 = vld [vmem:[%s794 + $0x8] sm:$0xff]
    %v797 = vld [vmem:[%s794 + $0x10] sm:$0xff]
    %v798 = vld [vmem:[%s794 + $0x18] sm:$0xff]
    %799 = vmatpush.bf16.msra.mxu0 %v510
    %800 = vmatpush.bf16.msra.mxu0 %v506
    %801 = vmatpush.bf16.msra.mxu0 %v502
    %802 = vmatpush.bf16.msra.mxu0 %v498
    %803 = vmatpush.bf16.msra.mxu0 %v494
    %804 = vmatpush.bf16.msra.mxu0 %v490
    %805 = vmatpush.bf16.msra.mxu0 %v486
    %806 = vmatpush.bf16.msra.mxu0 %v482
    %807 = vmatmul.bf16.gmra.mxu0 %v791
    %v808 = vpop.f32.mrf.mxu0
    %v809 = vadd.f32 0.0, %v808
    %v810 = vpop.f32.mrf.mxu0
    %811 = vdwg.mxu0
    %812 = vmatpush.bf16.msra.mxu0 %v511
    %813 = vmatpush.bf16.msra.mxu0 %v507
    %814 = vmatpush.bf16.msra.mxu0 %v503
    %815 = vmatpush.bf16.msra.mxu0 %v499
    %816 = vmatpush.bf16.msra.mxu0 %v495
    %817 = vmatpush.bf16.msra.mxu0 %v491
    %818 = vmatpush.bf16.msra.mxu0 %v487
    %819 = vmatpush.bf16.msra.mxu0 %v483
    %820 = vmatmul.bf16.gmra.mxu0 %v791
    %v821 = vpop.f32.mrf.mxu0
    %v822 = vadd.f32 0.0, %v821
    %v823 = vpop.f32.mrf.mxu0
    %824 = vdwg.mxu0
    %825 = vmatpush.bf16.msra.mxu0 %v512
    %826 = vmatpush.bf16.msra.mxu0 %v508
    %827 = vmatpush.bf16.msra.mxu0 %v504
    %828 = vmatpush.bf16.msra.mxu0 %v500
    %829 = vmatpush.bf16.msra.mxu0 %v496
    %830 = vmatpush.bf16.msra.mxu0 %v492
    %831 = vmatpush.bf16.msra.mxu0 %v488
    %832 = vmatpush.bf16.msra.mxu0 %v484
    %833 = vmatmul.bf16.gmra.mxu0 %v791
    %v834 = vpop.f32.mrf.mxu0
    %v835 = vadd.f32 0.0, %v834
    %v836 = vpop.f32.mrf.mxu0
    %837 = vdwg.mxu0
    %838 = vmatpush.bf16.msra.mxu0 %v513
    %839 = vmatpush.bf16.msra.mxu0 %v509
    %840 = vmatpush.bf16.msra.mxu0 %v505
    %841 = vmatpush.bf16.msra.mxu0 %v501
    %842 = vmatpush.bf16.msra.mxu0 %v497
    %843 = vmatpush.bf16.msra.mxu0 %v493
    %844 = vmatpush.bf16.msra.mxu0 %v489
    %845 = vmatpush.bf16.msra.mxu0 %v485
    %846 = vmatmul.bf16.gmra.mxu0 %v791
    %v847 = vpop.f32.mrf.mxu0
    %v848 = vadd.f32 0.0, %v847
    %v849 = vpop.f32.mrf.mxu0
    %850 = vdwg.mxu0
    %v851 = vadd.f32 %v795, %v809
    %v852 = vadd.f32 %v796, %v822
    %v853 = vadd.f32 %v797, %v835
    %v854 = vadd.f32 %v798, %v848
    %v855 = vxor.u32 %v851, 2147483648
    %v856 = vmul.f32 %v855, 1.442695
    %v857 = vpow.pop %v856
    %v858 = vadd.f32 %v857, 1.0
    %v859 = vrcp.pop %v858
    %v860 = vmul.f32 %v858, %v859
    %v861 = vsub.f32 1.0, %v860
    %v862 = vmul.f32 %v859, %v861
    %v863 = vadd.f32 %v859, %v862
    %vm864 = vweird.f32 %v858
    %vm865 = vweird.f32 %v859
    %vm866 = vmor %vm864, %vm865
    %v867 = vsel %vm866, %v859, %v863
    %v868 = vand.u32 2147483647, %v858
    %vm869 = vcmp.eq.f32.partialorder %v868, 8.507059e+37
    %v870 = vand.u32 %v858, 2147483648
    %v871 = vor.u32 1.1754944e-38, %v870
    %v872 = vsel %vm869, %v871, %v867
    %v873 = vmul.f32 1.0, %v872
    %v874 = vxor.u32 %v852, 2147483648
    %v875 = vmul.f32 %v874, 1.442695
    %v876 = vpow.pop %v875
    %v877 = vadd.f32 %v876, 1.0
    %v878 = vrcp.pop %v877
    %v879 = vmul.f32 %v877, %v878
    %v880 = vsub.f32 1.0, %v879
    %v881 = vmul.f32 %v878, %v880
    %v882 = vadd.f32 %v878, %v881
    %vm883 = vweird.f32 %v877
    %vm884 = vweird.f32 %v878
    %vm885 = vmor %vm883, %vm884
    %v886 = vsel %vm885, %v878, %v882
    %v887 = vand.u32 2147483647, %v877
    %vm888 = vcmp.eq.f32.partialorder %v887, 8.507059e+37
    %v889 = vand.u32 %v877, 2147483648
    %v890 = vor.u32 1.1754944e-38, %v889
    %v891 = vsel %vm888, %v890, %v886
    %v892 = vmul.f32 1.0, %v891
    %v893 = vtanh.pop %v853
    %v894 = vxor.u32 %v854, 2147483648
    %v895 = vmul.f32 %v894, 1.442695
    %v896 = vpow.pop %v895
    %v897 = vadd.f32 %v896, 1.0
    %v898 = vrcp.pop %v897
    %v899 = vmul.f32 %v897, %v898
    %v900 = vsub.f32 1.0, %v899
    %v901 = vmul.f32 %v898, %v900
    %v902 = vadd.f32 %v898, %v901
    %vm903 = vweird.f32 %v897
    %vm904 = vweird.f32 %v898
    %vm905 = vmor %vm903, %vm904
    %v906 = vsel %vm905, %v898, %v902
    %v907 = vand.u32 2147483647, %v897
    %vm908 = vcmp.eq.f32.partialorder %v907, 8.507059e+37
    %v909 = vand.u32 %v897, 2147483648
    %v910 = vor.u32 1.1754944e-38, %v909
    %v911 = vsel %vm908, %v910, %v906
    %v912 = vmul.f32 1.0, %v911
    %v913 = vmul.f32 %v892, %v788
    %v914 = vmul.f32 %v873, %v893
    %v915 = vadd.f32 %v913, %v914
    %v916 = vtanh.pop %v915
    %v917 = vmul.f32 %v912, %v916
    %v918 = vpack.c.bf16 %v917, %v917
    %s919 = scalar_lea.vmem [#allocation16], 8
    %920 = vst [vmem:[%s919] sm:$0xf] %v918
    %s921 = scalar_lea.vmem [#allocation2], 96
    %v922 = vld [vmem:[%s921] sm:$0xff]
    %v923 = vld [vmem:[%s921 + $0x8] sm:$0xff]
    %v924 = vld [vmem:[%s921 + $0x10] sm:$0xff]
    %v925 = vld [vmem:[%s921 + $0x18] sm:$0xff]
    %926 = vmatpush.bf16.msra.mxu0 %v510
    %927 = vmatpush.bf16.msra.mxu0 %v506
    %928 = vmatpush.bf16.msra.mxu0 %v502
    %929 = vmatpush.bf16.msra.mxu0 %v498
    %930 = vmatpush.bf16.msra.mxu0 %v494
    %931 = vmatpush.bf16.msra.mxu0 %v490
    %932 = vmatpush.bf16.msra.mxu0 %v486
    %933 = vmatpush.bf16.msra.mxu0 %v482
    %934 = vmatmul.bf16.gmra.mxu0 %v918
    %v935 = vpop.f32.mrf.mxu0
    %v936 = vadd.f32 0.0, %v935
    %v937 = vpop.f32.mrf.mxu0
    %938 = vdwg.mxu0
    %939 = vmatpush.bf16.msra.mxu0 %v511
    %940 = vmatpush.bf16.msra.mxu0 %v507
    %941 = vmatpush.bf16.msra.mxu0 %v503
    %942 = vmatpush.bf16.msra.mxu0 %v499
    %943 = vmatpush.bf16.msra.mxu0 %v495
    %944 = vmatpush.bf16.msra.mxu0 %v491
    %945 = vmatpush.bf16.msra.mxu0 %v487
    %946 = vmatpush.bf16.msra.mxu0 %v483
    %947 = vmatmul.bf16.gmra.mxu0 %v918
    %v948 = vpop.f32.mrf.mxu0
    %v949 = vadd.f32 0.0, %v948
    %v950 = vpop.f32.mrf.mxu0
    %951 = vdwg.mxu0
    %952 = vmatpush.bf16.msra.mxu0 %v512
    %953 = vmatpush.bf16.msra.mxu0 %v508
    %954 = vmatpush.bf16.msra.mxu0 %v504
    %955 = vmatpush.bf16.msra.mxu0 %v500
    %956 = vmatpush.bf16.msra.mxu0 %v496
    %957 = vmatpush.bf16.msra.mxu0 %v492
    %958 = vmatpush.bf16.msra.mxu0 %v488
    %959 = vmatpush.bf16.msra.mxu0 %v484
    %960 = vmatmul.bf16.gmra.mxu0 %v918
    %v961 = vpop.f32.mrf.mxu0
    %v962 = vadd.f32 0.0, %v961
    %v963 = vpop.f32.mrf.mxu0
    %964 = vdwg.mxu0
    %965 = vmatpush.bf16.msra.mxu0 %v513
    %966 = vmatpush.bf16.msra.mxu0 %v509
    %967 = vmatpush.bf16.msra.mxu0 %v505
    %968 = vmatpush.bf16.msra.mxu0 %v501
    %969 = vmatpush.bf16.msra.mxu0 %v497
    %970 = vmatpush.bf16.msra.mxu0 %v493
    %971 = vmatpush.bf16.msra.mxu0 %v489
    %972 = vmatpush.bf16.msra.mxu0 %v485
    %973 = vmatmul.bf16.gmra.mxu0 %v918
    %v974 = vpop.f32.mrf.mxu0
    %v975 = vadd.f32 0.0, %v974
    %v976 = vpop.f32.mrf.mxu0
    %977 = vdwg.mxu0
    %v978 = vadd.f32 %v922, %v936
    %v979 = vadd.f32 %v923, %v949
    %v980 = vadd.f32 %v924, %v962
    %v981 = vadd.f32 %v925, %v975
    %v982 = vxor.u32 %v978, 2147483648
    %v983 = vmul.f32 %v982, 1.442695
    %v984 = vpow.pop %v983
    %v985 = vadd.f32 %v984, 1.0
    %v986 = vrcp.pop %v985
    %v987 = vmul.f32 %v985, %v986
    %v988 = vsub.f32 1.0, %v987
    %v989 = vmul.f32 %v986, %v988
    %v990 = vadd.f32 %v986, %v989
    %vm991 = vweird.f32 %v985
    %vm992 = vweird.f32 %v986
    %vm993 = vmor %vm991, %vm992
    %v994 = vsel %vm993, %v986, %v990
    %v995 = vand.u32 2147483647, %v985
    %vm996 = vcmp.eq.f32.partialorder %v995, 8.507059e+37
    %v997 = vand.u32 %v985, 2147483648
    %v998 = vor.u32 1.1754944e-38, %v997
    %v999 = vsel %vm996, %v998, %v994
    %v1000 = vmul.f32 1.0, %v999
    %v1001 = vxor.u32 %v979, 2147483648
    %v1002 = vmul.f32 %v1001, 1.442695
    %v1003 = vpow.pop %v1002
    %v1004 = vadd.f32 %v1003, 1.0
    %v1005 = vrcp.pop %v1004
    %v1006 = vmul.f32 %v1004, %v1005
    %v1007 = vsub.f32 1.0, %v1006
    %v1008 = vmul.f32 %v1005, %v1007
    %v1009 = vadd.f32 %v1005, %v1008
    %vm1010 = vweird.f32 %v1004
    %vm1011 = vweird.f32 %v1005
    %vm1012 = vmor %vm1010, %vm1011
    %v1013 = vsel %vm1012, %v1005, %v1009
    %v1014 = vand.u32 2147483647, %v1004
    %vm1015 = vcmp.eq.f32.partialorder %v1014, 8.507059e+37
    %v1016 = vand.u32 %v1004, 2147483648
    %v1017 = vor.u32 1.1754944e-38, %v1016
    %v1018 = vsel %vm1015, %v1017, %v1013
    %v1019 = vmul.f32 1.0, %v1018
    %v1020 = vtanh.pop %v980
    %v1021 = vxor.u32 %v981, 2147483648
    %v1022 = vmul.f32 %v1021, 1.442695
    %v1023 = vpow.pop %v1022
    %v1024 = vadd.f32 %v1023, 1.0
    %v1025 = vrcp.pop %v1024
    %v1026 = vmul.f32 %v1024, %v1025
    %v1027 = vsub.f32 1.0, %v1026
    %v1028 = vmul.f32 %v1025, %v1027
    %v1029 = vadd.f32 %v1025, %v1028
    %vm1030 = vweird.f32 %v1024
    %vm1031 = vweird.f32 %v1025
    %vm1032 = vmor %vm1030, %vm1031
    %v1033 = vsel %vm1032, %v1025, %v1029
    %v1034 = vand.u32 2147483647, %v1024
    %vm1035 = vcmp.eq.f32.partialorder %v1034, 8.507059e+37
    %v1036 = vand.u32 %v1024, 2147483648
    %v1037 = vor.u32 1.1754944e-38, %v1036
    %v1038 = vsel %vm1035, %v1037, %v1033
    %v1039 = vmul.f32 1.0, %v1038
    %v1040 = vmul.f32 %v1019, %v915
    %v1041 = vmul.f32 %v1000, %v1020
    %v1042 = vadd.f32 %v1040, %v1041
    %v1043 = vtanh.pop %v1042
    %v1044 = vmul.f32 %v1039, %v1043
    %v1045 = vpack.c.bf16 %v1044, %v1044
    %s1046 = scalar_lea.vmem [#allocation16], 12
    %1047 = vst [vmem:[%s1046] sm:$0xf] %v1045
    %s1048 = scalar_lea.vmem [#allocation2], 128
    %v1049 = vld [vmem:[%s1048] sm:$0xff]
    %v1050 = vld [vmem:[%s1048 + $0x8] sm:$0xff]
    %v1051 = vld [vmem:[%s1048 + $0x10] sm:$0xff]
    %v1052 = vld [vmem:[%s1048 + $0x18] sm:$0xff]
    %1053 = vmatpush.bf16.msra.mxu0 %v510
    %1054 = vmatpush.bf16.msra.mxu0 %v506
    %1055 = vmatpush.bf16.msra.mxu0 %v502
    %1056 = vmatpush.bf16.msra.mxu0 %v498
    %1057 = vmatpush.bf16.msra.mxu0 %v494
    %1058 = vmatpush.bf16.msra.mxu0 %v490
    %1059 = vmatpush.bf16.msra.mxu0 %v486
    %1060 = vmatpush.bf16.msra.mxu0 %v482
    %1061 = vmatmul.bf16.gmra.mxu0 %v1045
    %v1062 = vpop.f32.mrf.mxu0
    %v1063 = vadd.f32 0.0, %v1062
    %v1064 = vpop.f32.mrf.mxu0
    %1065 = vdwg.mxu0
    %1066 = vmatpush.bf16.msra.mxu0 %v511
    %1067 = vmatpush.bf16.msra.mxu0 %v507
    %1068 = vmatpush.bf16.msra.mxu0 %v503
    %1069 = vmatpush.bf16.msra.mxu0 %v499
    %1070 = vmatpush.bf16.msra.mxu0 %v495
    %1071 = vmatpush.bf16.msra.mxu0 %v491
    %1072 = vmatpush.bf16.msra.mxu0 %v487
    %1073 = vmatpush.bf16.msra.mxu0 %v483
    %1074 = vmatmul.bf16.gmra.mxu0 %v1045
    %v1075 = vpop.f32.mrf.mxu0
    %v1076 = vadd.f32 0.0, %v1075
    %v1077 = vpop.f32.mrf.mxu0
    %1078 = vdwg.mxu0
    %1079 = vmatpush.bf16.msra.mxu0 %v512
    %1080 = vmatpush.bf16.msra.mxu0 %v508
    %1081 = vmatpush.bf16.msra.mxu0 %v504
    %1082 = vmatpush.bf16.msra.mxu0 %v500
    %1083 = vmatpush.bf16.msra.mxu0 %v496
    %1084 = vmatpush.bf16.msra.mxu0 %v492
    %1085 = vmatpush.bf16.msra.mxu0 %v488
    %1086 = vmatpush.bf16.msra.mxu0 %v484
    %1087 = vmatmul.bf16.gmra.mxu0 %v1045
    %v1088 = vpop.f32.mrf.mxu0
    %v1089 = vadd.f32 0.0, %v1088
    %v1090 = vpop.f32.mrf.mxu0
    %1091 = vdwg.mxu0
    %1092 = vmatpush.bf16.msra.mxu0 %v513
    %1093 = vmatpush.bf16.msra.mxu0 %v509
    %1094 = vmatpush.bf16.msra.mxu0 %v505
    %1095 = vmatpush.bf16.msra.mxu0 %v501
    %1096 = vmatpush.bf16.msra.mxu0 %v497
    %1097 = vmatpush.bf16.msra.mxu0 %v493
    %1098 = vmatpush.bf16.msra.mxu0 %v489
    %1099 = vmatpush.bf16.msra.mxu0 %v485
    %1100 = vmatmul.bf16.gmra.mxu0 %v1045
    %v1101 = vpop.f32.mrf.mxu0
    %v1102 = vadd.f32 0.0, %v1101
    %v1103 = vpop.f32.mrf.mxu0
    %1104 = vdwg.mxu0
    %v1105 = vadd.f32 %v1049, %v1063
    %v1106 = vadd.f32 %v1050, %v1076
    %v1107 = vadd.f32 %v1051, %v1089
    %v1108 = vadd.f32 %v1052, %v1102
    %v1109 = vxor.u32 %v1105, 2147483648
    %v1110 = vmul.f32 %v1109, 1.442695
    %v1111 = vpow.pop %v1110
    %v1112 = vadd.f32 %v1111, 1.0
    %v1113 = vrcp.pop %v1112
    %v1114 = vmul.f32 %v1112, %v1113
    %v1115 = vsub.f32 1.0, %v1114
    %v1116 = vmul.f32 %v1113, %v1115
    %v1117 = vadd.f32 %v1113, %v1116
    %vm1118 = vweird.f32 %v1112
    %vm1119 = vweird.f32 %v1113
    %vm1120 = vmor %vm1118, %vm1119
    %v1121 = vsel %vm1120, %v1113, %v1117
    %v1122 = vand.u32 2147483647, %v1112
    %vm1123 = vcmp.eq.f32.partialorder %v1122, 8.507059e+37
    %v1124 = vand.u32 %v1112, 2147483648
    %v1125 = vor.u32 1.1754944e-38, %v1124
    %v1126 = vsel %vm1123, %v1125, %v1121
    %v1127 = vmul.f32 1.0, %v1126
    %v1128 = vxor.u32 %v1106, 2147483648
    %v1129 = vmul.f32 %v1128, 1.442695
    %v1130 = vpow.pop %v1129
    %v1131 = vadd.f32 %v1130, 1.0
    %v1132 = vrcp.pop %v1131
    %v1133 = vmul.f32 %v1131, %v1132
    %v1134 = vsub.f32 1.0, %v1133
    %v1135 = vmul.f32 %v1132, %v1134
    %v1136 = vadd.f32 %v1132, %v1135
    %vm1137 = vweird.f32 %v1131
    %vm1138 = vweird.f32 %v1132
    %vm1139 = vmor %vm1137, %vm1138
    %v1140 = vsel %vm1139, %v1132, %v1136
    %v1141 = vand.u32 2147483647, %v1131
    %vm1142 = vcmp.eq.f32.partialorder %v1141, 8.507059e+37
    %v1143 = vand.u32 %v1131, 2147483648
    %v1144 = vor.u32 1.1754944e-38, %v1143
    %v1145 = vsel %vm1142, %v1144, %v1140
    %v1146 = vmul.f32 1.0, %v1145
    %v1147 = vtanh.pop %v1107
    %v1148 = vxor.u32 %v1108, 2147483648
    %v1149 = vmul.f32 %v1148, 1.442695
    %v1150 = vpow.pop %v1149
    %v1151 = vadd.f32 %v1150, 1.0
    %v1152 = vrcp.pop %v1151
    %v1153 = vmul.f32 %v1151, %v1152
    %v1154 = vsub.f32 1.0, %v1153
    %v1155 = vmul.f32 %v1152, %v1154
    %v1156 = vadd.f32 %v1152, %v1155
    %vm1157 = vweird.f32 %v1151
    %vm1158 = vweird.f32 %v1152
    %vm1159 = vmor %vm1157, %vm1158
    %v1160 = vsel %vm1159, %v1152, %v1156
    %v1161 = vand.u32 2147483647, %v1151
    %vm1162 = vcmp.eq.f32.partialorder %v1161, 8.507059e+37
    %v1163 = vand.u32 %v1151, 2147483648
    %v1164 = vor.u32 1.1754944e-38, %v1163
    %v1165 = vsel %vm1162, %v1164, %v1160
    %v1166 = vmul.f32 1.0, %v1165
    %v1167 = vmul.f32 %v1146, %v1042
    %v1168 = vmul.f32 %v1127, %v1147
    %v1169 = vadd.f32 %v1167, %v1168
    %v1170 = vtanh.pop %v1169
    %v1171 = vmul.f32 %v1166, %v1170
    %v1172 = vpack.c.bf16 %v1171, %v1171
    %s1173 = scalar_lea.vmem [#allocation16], 16
    %1174 = vst [vmem:[%s1173] sm:$0xf] %v1172
    %s1175 = scalar_lea.vmem [#allocation2], 160
    %v1176 = vld [vmem:[%s1175] sm:$0xff]
    %v1177 = vld [vmem:[%s1175 + $0x8] sm:$0xff]
    %v1178 = vld [vmem:[%s1175 + $0x10] sm:$0xff]
    %v1179 = vld [vmem:[%s1175 + $0x18] sm:$0xff]
    %1180 = vmatpush.bf16.msra.mxu0 %v510
    %1181 = vmatpush.bf16.msra.mxu0 %v506
    %1182 = vmatpush.bf16.msra.mxu0 %v502
    %1183 = vmatpush.bf16.msra.mxu0 %v498
    %1184 = vmatpush.bf16.msra.mxu0 %v494
    %1185 = vmatpush.bf16.msra.mxu0 %v490
    %1186 = vmatpush.bf16.msra.mxu0 %v486
    %1187 = vmatpush.bf16.msra.mxu0 %v482
    %1188 = vmatmul.bf16.gmra.mxu0 %v1172
    %v1189 = vpop.f32.mrf.mxu0
    %v1190 = vadd.f32 0.0, %v1189
    %v1191 = vpop.f32.mrf.mxu0
    %1192 = vdwg.mxu0
    %1193 = vmatpush.bf16.msra.mxu0 %v511
    %1194 = vmatpush.bf16.msra.mxu0 %v507
    %1195 = vmatpush.bf16.msra.mxu0 %v503
    %1196 = vmatpush.bf16.msra.mxu0 %v499
    %1197 = vmatpush.bf16.msra.mxu0 %v495
    %1198 = vmatpush.bf16.msra.mxu0 %v491
    %1199 = vmatpush.bf16.msra.mxu0 %v487
    %1200 = vmatpush.bf16.msra.mxu0 %v483
    %1201 = vmatmul.bf16.gmra.mxu0 %v1172
    %v1202 = vpop.f32.mrf.mxu0
    %v1203 = vadd.f32 0.0, %v1202
    %v1204 = vpop.f32.mrf.mxu0
    %1205 = vdwg.mxu0
    %1206 = vmatpush.bf16.msra.mxu0 %v512
    %1207 = vmatpush.bf16.msra.mxu0 %v508
    %1208 = vmatpush.bf16.msra.mxu0 %v504
    %1209 = vmatpush.bf16.msra.mxu0 %v500
    %1210 = vmatpush.bf16.msra.mxu0 %v496
    %1211 = vmatpush.bf16.msra.mxu0 %v492
    %1212 = vmatpush.bf16.msra.mxu0 %v488
    %1213 = vmatpush.bf16.msra.mxu0 %v484
    %1214 = vmatmul.bf16.gmra.mxu0 %v1172
    %v1215 = vpop.f32.mrf.mxu0
    %v1216 = vadd.f32 0.0, %v1215
    %v1217 = vpop.f32.mrf.mxu0
    %1218 = vdwg.mxu0
    %1219 = vmatpush.bf16.msra.mxu0 %v513
    %1220 = vmatpush.bf16.msra.mxu0 %v509
    %1221 = vmatpush.bf16.msra.mxu0 %v505
    %1222 = vmatpush.bf16.msra.mxu0 %v501
    %1223 = vmatpush.bf16.msra.mxu0 %v497
    %1224 = vmatpush.bf16.msra.mxu0 %v493
    %1225 = vmatpush.bf16.msra.mxu0 %v489
    %1226 = vmatpush.bf16.msra.mxu0 %v485
    %1227 = vmatmul.bf16.gmra.mxu0 %v1172
    %v1228 = vpop.f32.mrf.mxu0
    %v1229 = vadd.f32 0.0, %v1228
    %v1230 = vpop.f32.mrf.mxu0
    %1231 = vdwg.mxu0
    %v1232 = vadd.f32 %v1176, %v1190
    %v1233 = vadd.f32 %v1177, %v1203
    %v1234 = vadd.f32 %v1178, %v1216
    %v1235 = vadd.f32 %v1179, %v1229
    %v1236 = vxor.u32 %v1232, 2147483648
    %v1237 = vmul.f32 %v1236, 1.442695
    %v1238 = vpow.pop %v1237
    %v1239 = vadd.f32 %v1238, 1.0
    %v1240 = vrcp.pop %v1239
    %v1241 = vmul.f32 %v1239, %v1240
    %v1242 = vsub.f32 1.0, %v1241
    %v1243 = vmul.f32 %v1240, %v1242
    %v1244 = vadd.f32 %v1240, %v1243
    %vm1245 = vweird.f32 %v1239
    %vm1246 = vweird.f32 %v1240
    %vm1247 = vmor %vm1245, %vm1246
    %v1248 = vsel %vm1247, %v1240, %v1244
    %v1249 = vand.u32 2147483647, %v1239
    %vm1250 = vcmp.eq.f32.partialorder %v1249, 8.507059e+37
    %v1251 = vand.u32 %v1239, 2147483648
    %v1252 = vor.u32 1.1754944e-38, %v1251
    %v1253 = vsel %vm1250, %v1252, %v1248
    %v1254 = vmul.f32 1.0, %v1253
    %v1255 = vxor.u32 %v1233, 2147483648
    %v1256 = vmul.f32 %v1255, 1.442695
    %v1257 = vpow.pop %v1256
    %v1258 = vadd.f32 %v1257, 1.0
    %v1259 = vrcp.pop %v1258
    %v1260 = vmul.f32 %v1258, %v1259
    %v1261 = vsub.f32 1.0, %v1260
    %v1262 = vmul.f32 %v1259, %v1261
    %v1263 = vadd.f32 %v1259, %v1262
    %vm1264 = vweird.f32 %v1258
    %vm1265 = vweird.f32 %v1259
    %vm1266 = vmor %vm1264, %vm1265
    %v1267 = vsel %vm1266, %v1259, %v1263
    %v1268 = vand.u32 2147483647, %v1258
    %vm1269 = vcmp.eq.f32.partialorder %v1268, 8.507059e+37
    %v1270 = vand.u32 %v1258, 2147483648
    %v1271 = vor.u32 1.1754944e-38, %v1270
    %v1272 = vsel %vm1269, %v1271, %v1267
    %v1273 = vmul.f32 1.0, %v1272
    %v1274 = vtanh.pop %v1234
    %v1275 = vxor.u32 %v1235, 2147483648
    %v1276 = vmul.f32 %v1275, 1.442695
    %v1277 = vpow.pop %v1276
    %v1278 = vadd.f32 %v1277, 1.0
    %v1279 = vrcp.pop %v1278
    %v1280 = vmul.f32 %v1278, %v1279
    %v1281 = vsub.f32 1.0, %v1280
    %v1282 = vmul.f32 %v1279, %v1281
    %v1283 = vadd.f32 %v1279, %v1282
    %vm1284 = vweird.f32 %v1278
    %vm1285 = vweird.f32 %v1279
    %vm1286 = vmor %vm1284, %vm1285
    %v1287 = vsel %vm1286, %v1279, %v1283
    %v1288 = vand.u32 2147483647, %v1278
    %vm1289 = vcmp.eq.f32.partialorder %v1288, 8.507059e+37
    %v1290 = vand.u32 %v1278, 2147483648
    %v1291 = vor.u32 1.1754944e-38, %v1290
    %v1292 = vsel %vm1289, %v1291, %v1287
    %v1293 = vmul.f32 1.0, %v1292
    %v1294 = vmul.f32 %v1273, %v1169
    %v1295 = vmul.f32 %v1254, %v1274
    %v1296 = vadd.f32 %v1294, %v1295
    %v1297 = vtanh.pop %v1296
    %v1298 = vmul.f32 %v1293, %v1297
    %v1299 = vpack.c.bf16 %v1298, %v1298
    %s1300 = scalar_lea.vmem [#allocation16], 20
    %1301 = vst [vmem:[%s1300] sm:$0xf] %v1299
    %s1302 = scalar_lea.vmem [#allocation2], 192
    %v1303 = vld [vmem:[%s1302] sm:$0xff]
    %v1304 = vld [vmem:[%s1302 + $0x8] sm:$0xff]
    %v1305 = vld [vmem:[%s1302 + $0x10] sm:$0xff]
    %v1306 = vld [vmem:[%s1302 + $0x18] sm:$0xff]
    %1307 = vmatpush.bf16.msra.mxu0 %v510
    %1308 = vmatpush.bf16.msra.mxu0 %v506
    %1309 = vmatpush.bf16.msra.mxu0 %v502
    %1310 = vmatpush.bf16.msra.mxu0 %v498
    %1311 = vmatpush.bf16.msra.mxu0 %v494
    %1312 = vmatpush.bf16.msra.mxu0 %v490
    %1313 = vmatpush.bf16.msra.mxu0 %v486
    %1314 = vmatpush.bf16.msra.mxu0 %v482
    %1315 = vmatmul.bf16.gmra.mxu0 %v1299
    %v1316 = vpop.f32.mrf.mxu0
    %v1317 = vadd.f32 0.0, %v1316
    %v1318 = vpop.f32.mrf.mxu0
    %1319 = vdwg.mxu0
    %1320 = vmatpush.bf16.msra.mxu0 %v511
    %1321 = vmatpush.bf16.msra.mxu0 %v507
    %1322 = vmatpush.bf16.msra.mxu0 %v503
    %1323 = vmatpush.bf16.msra.mxu0 %v499
    %1324 = vmatpush.bf16.msra.mxu0 %v495
    %1325 = vmatpush.bf16.msra.mxu0 %v491
    %1326 = vmatpush.bf16.msra.mxu0 %v487
    %1327 = vmatpush.bf16.msra.mxu0 %v483
    %1328 = vmatmul.bf16.gmra.mxu0 %v1299
    %v1329 = vpop.f32.mrf.mxu0
    %v1330 = vadd.f32 0.0, %v1329
    %v1331 = vpop.f32.mrf.mxu0
    %1332 = vdwg.mxu0
    %1333 = vmatpush.bf16.msra.mxu0 %v512
    %1334 = vmatpush.bf16.msra.mxu0 %v508
    %1335 = vmatpush.bf16.msra.mxu0 %v504
    %1336 = vmatpush.bf16.msra.mxu0 %v500
    %1337 = vmatpush.bf16.msra.mxu0 %v496
    %1338 = vmatpush.bf16.msra.mxu0 %v492
    %1339 = vmatpush.bf16.msra.mxu0 %v488
    %1340 = vmatpush.bf16.msra.mxu0 %v484
    %1341 = vmatmul.bf16.gmra.mxu0 %v1299
    %v1342 = vpop.f32.mrf.mxu0
    %v1343 = vadd.f32 0.0, %v1342
    %v1344 = vpop.f32.mrf.mxu0
    %1345 = vdwg.mxu0
    %1346 = vmatpush.bf16.msra.mxu0 %v513
    %1347 = vmatpush.bf16.msra.mxu0 %v509
    %1348 = vmatpush.bf16.msra.mxu0 %v505
    %1349 = vmatpush.bf16.msra.mxu0 %v501
    %1350 = vmatpush.bf16.msra.mxu0 %v497
    %1351 = vmatpush.bf16.msra.mxu0 %v493
    %1352 = vmatpush.bf16.msra.mxu0 %v489
    %1353 = vmatpush.bf16.msra.mxu0 %v485
    %1354 = vmatmul.bf16.gmra.mxu0 %v1299
    %v1355 = vpop.f32.mrf.mxu0
    %v1356 = vadd.f32 0.0, %v1355
    %v1357 = vpop.f32.mrf.mxu0
    %1358 = vdwg.mxu0
    %v1359 = vadd.f32 %v1303, %v1317
    %v1360 = vadd.f32 %v1304, %v1330
    %v1361 = vadd.f32 %v1305, %v1343
    %v1362 = vadd.f32 %v1306, %v1356
    %v1363 = vxor.u32 %v1359, 2147483648
    %v1364 = vmul.f32 %v1363, 1.442695
    %v1365 = vpow.pop %v1364
    %v1366 = vadd.f32 %v1365, 1.0
    %v1367 = vrcp.pop %v1366
    %v1368 = vmul.f32 %v1366, %v1367
    %v1369 = vsub.f32 1.0, %v1368
    %v1370 = vmul.f32 %v1367, %v1369
    %v1371 = vadd.f32 %v1367, %v1370
    %vm1372 = vweird.f32 %v1366
    %vm1373 = vweird.f32 %v1367
    %vm1374 = vmor %vm1372, %vm1373
    %v1375 = vsel %vm1374, %v1367, %v1371
    %v1376 = vand.u32 2147483647, %v1366
    %vm1377 = vcmp.eq.f32.partialorder %v1376, 8.507059e+37
    %v1378 = vand.u32 %v1366, 2147483648
    %v1379 = vor.u32 1.1754944e-38, %v1378
    %v1380 = vsel %vm1377, %v1379, %v1375
    %v1381 = vmul.f32 1.0, %v1380
    %v1382 = vxor.u32 %v1360, 2147483648
    %v1383 = vmul.f32 %v1382, 1.442695
    %v1384 = vpow.pop %v1383
    %v1385 = vadd.f32 %v1384, 1.0
    %v1386 = vrcp.pop %v1385
    %v1387 = vmul.f32 %v1385, %v1386
    %v1388 = vsub.f32 1.0, %v1387
    %v1389 = vmul.f32 %v1386, %v1388
    %v1390 = vadd.f32 %v1386, %v1389
    %vm1391 = vweird.f32 %v1385
    %vm1392 = vweird.f32 %v1386
    %vm1393 = vmor %vm1391, %vm1392
    %v1394 = vsel %vm1393, %v1386, %v1390
    %v1395 = vand.u32 2147483647, %v1385
    %vm1396 = vcmp.eq.f32.partialorder %v1395, 8.507059e+37
    %v1397 = vand.u32 %v1385, 2147483648
    %v1398 = vor.u32 1.1754944e-38, %v1397
    %v1399 = vsel %vm1396, %v1398, %v1394
    %v1400 = vmul.f32 1.0, %v1399
    %v1401 = vtanh.pop %v1361
    %v1402 = vxor.u32 %v1362, 2147483648
    %v1403 = vmul.f32 %v1402, 1.442695
    %v1404 = vpow.pop %v1403
    %v1405 = vadd.f32 %v1404, 1.0
    %v1406 = vrcp.pop %v1405
    %v1407 = vmul.f32 %v1405, %v1406
    %v1408 = vsub.f32 1.0, %v1407
    %v1409 = vmul.f32 %v1406, %v1408
    %v1410 = vadd.f32 %v1406, %v1409
    %vm1411 = vweird.f32 %v1405
    %vm1412 = vweird.f32 %v1406
    %vm1413 = vmor %vm1411, %vm1412
    %v1414 = vsel %vm1413, %v1406, %v1410
    %v1415 = vand.u32 2147483647, %v1405
    %vm1416 = vcmp.eq.f32.partialorder %v1415, 8.507059e+37
    %v1417 = vand.u32 %v1405, 2147483648
    %v1418 = vor.u32 1.1754944e-38, %v1417
    %v1419 = vsel %vm1416, %v1418, %v1414
    %v1420 = vmul.f32 1.0, %v1419
    %v1421 = vmul.f32 %v1400, %v1296
    %v1422 = vmul.f32 %v1381, %v1401
    %v1423 = vadd.f32 %v1421, %v1422
    %v1424 = vtanh.pop %v1423
    %v1425 = vmul.f32 %v1420, %v1424
    %v1426 = vpack.c.bf16 %v1425, %v1425
    %s1427 = scalar_lea.vmem [#allocation16], 24
    %1428 = vst [vmem:[%s1427] sm:$0xf] %v1426
    %s1429 = scalar_lea.vmem [#allocation2], 224
    %v1430 = vld [vmem:[%s1429] sm:$0xff]
    %v1431 = vld [vmem:[%s1429 + $0x8] sm:$0xff]
    %v1432 = vld [vmem:[%s1429 + $0x10] sm:$0xff]
    %v1433 = vld [vmem:[%s1429 + $0x18] sm:$0xff]
    %1434 = vmatpush.bf16.msra.mxu0 %v510
    %1435 = vmatpush.bf16.msra.mxu0 %v506
    %1436 = vmatpush.bf16.msra.mxu0 %v502
    %1437 = vmatpush.bf16.msra.mxu0 %v498
    %1438 = vmatpush.bf16.msra.mxu0 %v494
    %1439 = vmatpush.bf16.msra.mxu0 %v490
    %1440 = vmatpush.bf16.msra.mxu0 %v486
    %1441 = vmatpush.bf16.msra.mxu0 %v482
    %1442 = vmatmul.bf16.gmra.mxu0 %v1426
    %v1443 = vpop.f32.mrf.mxu0
    %v1444 = vadd.f32 0.0, %v1443
    %v1445 = vpop.f32.mrf.mxu0
    %1446 = vdwg.mxu0
    %1447 = vmatpush.bf16.msra.mxu0 %v511
    %1448 = vmatpush.bf16.msra.mxu0 %v507
    %1449 = vmatpush.bf16.msra.mxu0 %v503
    %1450 = vmatpush.bf16.msra.mxu0 %v499
    %1451 = vmatpush.bf16.msra.mxu0 %v495
    %1452 = vmatpush.bf16.msra.mxu0 %v491
    %1453 = vmatpush.bf16.msra.mxu0 %v487
    %1454 = vmatpush.bf16.msra.mxu0 %v483
    %1455 = vmatmul.bf16.gmra.mxu0 %v1426
    %v1456 = vpop.f32.mrf.mxu0
    %v1457 = vadd.f32 0.0, %v1456
    %v1458 = vpop.f32.mrf.mxu0
    %1459 = vdwg.mxu0
    %1460 = vmatpush.bf16.msra.mxu0 %v512
    %1461 = vmatpush.bf16.msra.mxu0 %v508
    %1462 = vmatpush.bf16.msra.mxu0 %v504
    %1463 = vmatpush.bf16.msra.mxu0 %v500
    %1464 = vmatpush.bf16.msra.mxu0 %v496
    %1465 = vmatpush.bf16.msra.mxu0 %v492
    %1466 = vmatpush.bf16.msra.mxu0 %v488
    %1467 = vmatpush.bf16.msra.mxu0 %v484
    %1468 = vmatmul.bf16.gmra.mxu0 %v1426
    %v1469 = vpop.f32.mrf.mxu0
    %v1470 = vadd.f32 0.0, %v1469
    %v1471 = vpop.f32.mrf.mxu0
    %1472 = vdwg.mxu0
    %1473 = vmatpush.bf16.msra.mxu0 %v513
    %1474 = vmatpush.bf16.msra.mxu0 %v509
    %1475 = vmatpush.bf16.msra.mxu0 %v505
    %1476 = vmatpush.bf16.msra.mxu0 %v501
    %1477 = vmatpush.bf16.msra.mxu0 %v497
    %1478 = vmatpush.bf16.msra.mxu0 %v493
    %1479 = vmatpush.bf16.msra.mxu0 %v489
    %1480 = vmatpush.bf16.msra.mxu0 %v485
    %1481 = vmatmul.bf16.gmra.mxu0 %v1426
    %v1482 = vpop.f32.mrf.mxu0
    %v1483 = vadd.f32 0.0, %v1482
    %v1484 = vpop.f32.mrf.mxu0
    %1485 = vdwg.mxu0
    %v1486 = vadd.f32 %v1430, %v1444
    %v1487 = vadd.f32 %v1431, %v1457
    %v1488 = vadd.f32 %v1432, %v1470
    %v1489 = vadd.f32 %v1433, %v1483
    %v1490 = vxor.u32 %v1486, 2147483648
    %v1491 = vmul.f32 %v1490, 1.442695
    %v1492 = vpow.pop %v1491
    %v1493 = vadd.f32 %v1492, 1.0
    %v1494 = vrcp.pop %v1493
    %v1495 = vmul.f32 %v1493, %v1494
    %v1496 = vsub.f32 1.0, %v1495
    %v1497 = vmul.f32 %v1494, %v1496
    %v1498 = vadd.f32 %v1494, %v1497
    %vm1499 = vweird.f32 %v1493
    %vm1500 = vweird.f32 %v1494
    %vm1501 = vmor %vm1499, %vm1500
    %v1502 = vsel %vm1501, %v1494, %v1498
    %v1503 = vand.u32 2147483647, %v1493
    %vm1504 = vcmp.eq.f32.partialorder %v1503, 8.507059e+37
    %v1505 = vand.u32 %v1493, 2147483648
    %v1506 = vor.u32 1.1754944e-38, %v1505
    %v1507 = vsel %vm1504, %v1506, %v1502
    %v1508 = vmul.f32 1.0, %v1507
    %v1509 = vxor.u32 %v1487, 2147483648
    %v1510 = vmul.f32 %v1509, 1.442695
    %v1511 = vpow.pop %v1510
    %v1512 = vadd.f32 %v1511, 1.0
    %v1513 = vrcp.pop %v1512
    %v1514 = vmul.f32 %v1512, %v1513
    %v1515 = vsub.f32 1.0, %v1514
    %v1516 = vmul.f32 %v1513, %v1515
    %v1517 = vadd.f32 %v1513, %v1516
    %vm1518 = vweird.f32 %v1512
    %vm1519 = vweird.f32 %v1513
    %vm1520 = vmor %vm1518, %vm1519
    %v1521 = vsel %vm1520, %v1513, %v1517
    %v1522 = vand.u32 2147483647, %v1512
    %vm1523 = vcmp.eq.f32.partialorder %v1522, 8.507059e+37
    %v1524 = vand.u32 %v1512, 2147483648
    %v1525 = vor.u32 1.1754944e-38, %v1524
    %v1526 = vsel %vm1523, %v1525, %v1521
    %v1527 = vmul.f32 1.0, %v1526
    %v1528 = vtanh.pop %v1488
    %v1529 = vxor.u32 %v1489, 2147483648
    %v1530 = vmul.f32 %v1529, 1.442695
    %v1531 = vpow.pop %v1530
    %v1532 = vadd.f32 %v1531, 1.0
    %v1533 = vrcp.pop %v1532
    %v1534 = vmul.f32 %v1532, %v1533
    %v1535 = vsub.f32 1.0, %v1534
    %v1536 = vmul.f32 %v1533, %v1535
    %v1537 = vadd.f32 %v1533, %v1536
    %vm1538 = vweird.f32 %v1532
    %vm1539 = vweird.f32 %v1533
    %vm1540 = vmor %vm1538, %vm1539
    %v1541 = vsel %vm1540, %v1533, %v1537
    %v1542 = vand.u32 2147483647, %v1532
    %vm1543 = vcmp.eq.f32.partialorder %v1542, 8.507059e+37
    %v1544 = vand.u32 %v1532, 2147483648
    %v1545 = vor.u32 1.1754944e-38, %v1544
    %v1546 = vsel %vm1543, %v1545, %v1541
    %v1547 = vmul.f32 1.0, %v1546
    %v1548 = vmul.f32 %v1527, %v1423
    %v1549 = vmul.f32 %v1508, %v1528
    %v1550 = vadd.f32 %v1548, %v1549
    %v1551 = vtanh.pop %v1550
    %v1552 = vmul.f32 %v1547, %v1551
    %v1553 = vpack.c.bf16 %v1552, %v1552
    %s1554 = scalar_lea.vmem [#allocation16], 28
    %1555 = vst [vmem:[%s1554] sm:$0xf] %v1553
    %1556 = vst [vmem:[#allocation3] sm:$0xff] %v1552
    %1557 = vst [vmem:[#allocation4] sm:$0xff] %v1550
    // Predicated region
    $region54: #{tpu_custom_call.1} parent=1 // pred_check
      %p1558 = pneg %p115
    $region55: #{tpu_custom_call.1} parent=1 // pred_check_branch
      %1560 = sbr.rel (%p1558) target = $region57
    $region56: #{tpu_custom_call.1} parent=1 // pred_region
      %1561 = vst [vmem:[#allocation17] sm:$0xff] %v1552
      %1562 = vst [vmem:[#allocation19] sm:$0xff] %v1550
    $region57: #{tpu_custom_call.1} parent=1 // pred_fallthru
      _
    // Predicated region
    $region58: #{tpu_custom_call.1} parent=1 // pred_check
      _
    $region59: #{tpu_custom_call.1} parent=1 // pred_check_branch
      %1564 = sbr.rel (0) target = $region61
    $region60: #{tpu_custom_call.1} parent=1 // pred_region
      %1566 = vsyncadd [#allocation7], 0
      %s1567 = sshll.u32 [#allocation16], 4
      %s1568 = int_to_ptr.vmem [resolvable:$true] %s1567
      %s1569 = sshll.u32 %s6, 4
      %s1570 = int_to_ptr.hbm [resolvable:$true] %s1569
      %1575 = dma.vmem_to_hbm [thread:$0]  %s1568, 512, %s1570, [#allocation7], 64, 64, 4
    $region61: #{tpu_custom_call.1} parent=1 // pred_fallthru
      _
    // Predicated region
    $region62: #{tpu_custom_call.1} parent=1 // pred_check
      _
    $region63: #{tpu_custom_call.1} parent=1 // pred_check_branch
      %1577 = sbr.rel (0) target = $region65
    $region64: #{tpu_custom_call.1} parent=1 // pred_region
      %1579 = vsyncadd [#allocation18], 0
      %s1581 = sshll.u32 [#allocation17], 4
      %s1582 = int_to_ptr.vmem [resolvable:$true] %s1581
      %s1583 = sshll.u32 %s7, 4
      %s1584 = int_to_ptr.hbm [resolvable:$true] %s1583
      %1586 = dma.vmem_to_hbm [thread:$0]  %s1582, 128, %s1584, [#allocation18]
    $region65: #{tpu_custom_call.1} parent=1 // pred_fallthru
      _
    // Predicated region
    $region66: #{tpu_custom_call.1} parent=1 // pred_check
      _
    $region67: #{tpu_custom_call.1} parent=1 // pred_check_branch
      %1588 = sbr.rel (0) target = $region69
    $region68: #{tpu_custom_call.1} parent=1 // pred_region
      %1590 = vsyncadd [#allocation18], 0
      %s1592 = sshll.u32 [#allocation19], 4
      %s1593 = int_to_ptr.vmem [resolvable:$true] %s1592
      %s1594 = sshll.u32 %s8, 4
      %s1595 = int_to_ptr.hbm [resolvable:$true] %s1594
      %1597 = dma.vmem_to_hbm [thread:$0]  %s1593, 128, %s1595, [#allocation18]
    $region69: #{tpu_custom_call.1} parent=1 // pred_fallthru
      _
    // Predicated region
    $region70: #{tpu_custom_call.1} parent=1 // pred_check
      _
    $region71: #{tpu_custom_call.1} parent=1 // pred_check_branch
      %1599 = sbr.rel (0) target = $region73
    $region72: #{tpu_custom_call.1} parent=1 // pred_region
      %1601 = dma.done [#allocation7], 512
    $region73: #{tpu_custom_call.1} parent=1 // pred_fallthru
      _
    // Predicated region
    $region74: #{tpu_custom_call.1} parent=1 // pred_check
      _
    $region75: #{tpu_custom_call.1} parent=1 // pred_check_branch
      %1603 = sbr.rel (0) target = $region77
    $region76: #{tpu_custom_call.1} parent=1 // pred_region
      %1605 = dma.done [#allocation18], 128
    $region77: #{tpu_custom_call.1} parent=1 // pred_fallthru
      _
    // Predicated region
    $region78: #{tpu_custom_call.1} parent=1 // pred_check
      _
    $region79: #{tpu_custom_call.1} parent=1 // pred_check_branch
      %1607 = sbr.rel (0) target = $region81
    $region80: #{tpu_custom_call.1} parent=1 // pred_region
      %1609 = dma.done [#allocation18], 128
    $region81: #{tpu_custom_call.1} parent=1 // pred_fallthru
      _
    %1610 = vsyncpa [#allocation6], 1
    %1611 = vsyncpa [#allocation9], 1
    %1612 = vsyncpa [#allocation12], 1
    %1613 = vsyncpa [#allocation15], 1
    %1614 = vsyncpa [#allocation7], 1
    %1615 = vsyncpa [#allocation18], 1

</llo_original>
